<compile_context>
chip_gen: v7x
topology: tpu7x:2x2x1
jax: 0.10.0
libtpu: 0.0.40
codegen_flags: <defaults>
</compile_context>

<pallas_src>
import jax
import jax.numpy as jnp
from jax import lax
from jax.experimental import pallas as pl
from jax.experimental.pallas import tpu as pltpu


def _make_block_lstm_kernel(num_layers, S, B, H):
    """Builds a kernel that runs `num_layers` LSTM layers over the full sequence.

    Positional refs:
      x_ref                    : (S*B, I0) f32   layer-0 input (row index = t*B + b)
      [wih_l, whh_l, b_l] * L  : (I_l,4H), (H,4H), (1,4H) f32  (pre-transposed,
                                 biases pre-summed on the host)
      y_ref                    : (S*B, H)  f32   last layer hidden states
    """

    def kernel(*refs):
        x_ref = refs[0]
        w_refs = refs[1:1 + 3 * num_layers]
        y_ref = refs[1 + 3 * num_layers]

        # Layer-0 input; deeper layers consume the previous layer's sequence,
        # carried purely in registers/VMEM values (no scratch round trip).
        xin = x_ref[...]                                      # (S*B, I0)

        for layer in range(num_layers):
            wih = w_refs[3 * layer][...]                      # (I, 4H)
            whh = w_refs[3 * layer + 1][...]                  # (H, 4H)
            b = w_refs[3 * layer + 2][...]                    # (1, 4H) = b_ih + b_hh

            # Hoisted, time-parallel input projection with bias folded in:
            # one MXU call with M = S*B rows, off the serial critical path.
            x_proj = jnp.dot(xin, wih, preferred_element_type=jnp.float32) + b

            h = jnp.zeros((B, H), jnp.float32)
            c = jnp.zeros((B, H), jnp.float32)
            hs = []

            # Fully unrolled time recurrence (static S): only the small
            # (B,H)x(H,4H) matmul + gate math sit on the serial path.
            for t in range(S):
                gates = x_proj[t * B:(t + 1) * B, :] + jnp.dot(
                    h, whh, preferred_element_type=jnp.float32)   # (B, 4H)
                # Full-width (4H = 128 lane) transcendentals, then slice.
                sig = jax.nn.sigmoid(gates)
                tnh = jnp.tanh(gates)
                i_g = sig[:, 0:H]                  # PyTorch gate order: i, f, g, o
                f_g = sig[:, H:2 * H]
                g_g = tnh[:, 2 * H:3 * H]
                o_g = sig[:, 3 * H:4 * H]
                c = f_g * c + i_g * g_g
                h = o_g * jnp.tanh(c)
                hs.append(h)

            # Stack this layer's whole sequence once; stays a value feeding the
            # next layer's hoisted projection directly.
            xin = jnp.concatenate(hs, axis=0)                 # (S*B, H)

        # Single dense store of the last layer's sequence.
        y_ref[...] = xin.astype(y_ref.dtype)

    return kernel


def block_lstm_forward(x, layer_params):
    """Equivalent of BlockLSTM.forward: x (batch, seq, time_steps) -> (seq, batch, H)."""
    B, S, I0 = x.shape
    H = layer_params[0][1].shape[1]
    L = len(layer_params)

    xs = jnp.swapaxes(x, 0, 1)                 # torch.transpose(x, 0, 1): (S, B, I0)
    x2d = xs.reshape(S * B, I0)                # row = t*B + b

    flat_inputs = [x2d]
    in_specs = [pl.BlockSpec((S * B, I0), lambda i: (0, 0))]
    for (w_ih, w_hh, b_ih, b_hh) in layer_params:
        wih_t = jnp.transpose(w_ih)            # (I, 4H)
        whh_t = jnp.transpose(w_hh)            # (H, 4H)
        bias = (b_ih + b_hh)[None, :]          # (1, 4H)
        flat_inputs += [wih_t, whh_t, bias]
        in_specs += [
            pl.BlockSpec(wih_t.shape, lambda i: (0, 0)),
            pl.BlockSpec(whh_t.shape, lambda i: (0, 0)),
            pl.BlockSpec(bias.shape, lambda i: (0, 0)),
        ]

    kernel = _make_block_lstm_kernel(L, S, B, H)
    y2d = pl.pallas_call(
        kernel,
        grid=(1,),
        in_specs=in_specs,
        out_specs=pl.BlockSpec((S * B, H), lambda i: (0, 0)),
        out_shape=jax.ShapeDtypeStruct((S * B, H), jnp.float32),
        compiler_params=pltpu.CompilerParams(
            dimension_semantics=("arbitrary",)),
    )(*flat_inputs)

    # TODO(synk): nn.Dropout(p=0.8) is stochastic in training mode; applied as
    # eval-mode identity here (deterministic forward).
    return y2d.reshape(S, B, H)


def init_params(key, time_steps, num_layers, lstm_hs):
    """Deterministic PyTorch-style LSTM parameter init: U(-1/sqrt(H), 1/sqrt(H))."""
    params = []
    k = 1.0 / float(lstm_hs) ** 0.5
    in_size = time_steps
    for _ in range(num_layers):
        key, k1, k2, k3, k4 = jax.random.split(key, 5)
        w_ih = jax.random.uniform(k1, (4 * lstm_hs, in_size), jnp.float32, -k, k)
        w_hh = jax.random.uniform(k2, (4 * lstm_hs, lstm_hs), jnp.float32, -k, k)
        b_ih = jax.random.uniform(k3, (4 * lstm_hs,), jnp.float32, -k, k)
        b_hh = jax.random.uniform(k4, (4 * lstm_hs,), jnp.float32, -k, k)
        params.append((w_ih, w_hh, b_ih, b_hh))
        in_size = lstm_hs
    return params


def lstm_reference(x, layer_params):
    """Pure-JAX reference (lax.scan) matching PyTorch nn.LSTM semantics."""
    xs = jnp.swapaxes(x, 0, 1)
    for (w_ih, w_hh, b_ih, b_hh) in layer_params:
        H = w_hh.shape[1]
        B = xs.shape[1]

        def step(carry, x_t, w_ih=w_ih, w_hh=w_hh, b_ih=b_ih, b_hh=b_hh, H=H):
            h, c = carry
            gates = x_t @ w_ih.T + h @ w_hh.T + b_ih + b_hh
            i = jax.nn.sigmoid(gates[:, 0:H])
            f = jax.nn.sigmoid(gates[:, H:2 * H])
            g = jnp.tanh(gates[:, 2 * H:3 * H])
            o = jax.nn.sigmoid(gates[:, 3 * H:4 * H])
            c = f * c + i * g
            h = o * jnp.tanh(c)
            return (h, c), h

        (_, _), ys = lax.scan(
            step, (jnp.zeros((B, H), jnp.float32), jnp.zeros((B, H), jnp.float32)), xs
        )
        xs = ys
    return xs


if __name__ == "__main__":
    # Small shapes consistent with the module: batch=2, seq=8, time_steps=16,
    # num_layers=2, lstm_hs=32.
    batch, seq, time_steps, num_layers, lstm_hs = 2, 8, 16, 2, 32

    key = jax.random.PRNGKey(0)
    key, xkey, pkey = jax.random.split(key, 3)
    x = jax.random.normal(xkey, (batch, seq, time_steps), dtype=jnp.float32)
    params = init_params(pkey, time_steps, num_layers, lstm_hs)

    y = jax.block_until_ready(block_lstm_forward(x, params))
    y_ref = jax.block_until_ready(lstm_reference(x, params))

    assert y.shape == (seq, batch, lstm_hs), y.shape
    assert jnp.allclose(y, y_ref, rtol=2e-5, atol=2e-5), "mismatch vs. JAX reference"

    print("KERNEL_OK")
</pallas_src>

<mosaic_0001>
module attributes {stable_mosaic.version = 11 : i64} {
  func.func @kernel(%arg0: i32, %arg1: memref<16x16xf32, #tpu.memory_space<vmem>>, %arg2: memref<16x128xf32, #tpu.memory_space<vmem>>, %arg3: memref<32x128xf32, #tpu.memory_space<vmem>>, %arg4: memref<1x128xf32, #tpu.memory_space<vmem>>, %arg5: memref<32x128xf32, #tpu.memory_space<vmem>>, %arg6: memref<32x128xf32, #tpu.memory_space<vmem>>, %arg7: memref<1x128xf32, #tpu.memory_space<vmem>>, %arg8: memref<16x32xf32, #tpu.memory_space<vmem>>) attributes {dimension_semantics = [#tpu.dimension_semantics<arbitrary>], iteration_bounds = array<i64: 1>, scalar_prefetch = 0 : i64, scratch_operands = 0 : i64, tpu.core_type = #tpu.core_type<tc>, window_params = [{pipeline_mode = #tpu.pipeline_mode<synchronous>, transform_indices = @transform_0, window_bounds = array<i64: 16, 16>}, {pipeline_mode = #tpu.pipeline_mode<synchronous>, transform_indices = @transform_1, window_bounds = array<i64: 16, 128>}, {pipeline_mode = #tpu.pipeline_mode<synchronous>, transform_indices = @transform_2, window_bounds = array<i64: 32, 128>}, {pipeline_mode = #tpu.pipeline_mode<synchronous>, transform_indices = @transform_3, window_bounds = array<i64: 1, 128>}, {pipeline_mode = #tpu.pipeline_mode<synchronous>, transform_indices = @transform_4, window_bounds = array<i64: 32, 128>}, {pipeline_mode = #tpu.pipeline_mode<synchronous>, transform_indices = @transform_5, window_bounds = array<i64: 32, 128>}, {pipeline_mode = #tpu.pipeline_mode<synchronous>, transform_indices = @transform_6, window_bounds = array<i64: 1, 128>}, {pipeline_mode = #tpu.pipeline_mode<synchronous>, transform_indices = @transform_7, window_bounds = array<i64: 16, 32>}]} {
    %c0 = arith.constant 0 : index
    %c0_0 = arith.constant 0 : index
    %0 = vector.load %arg1[%c0, %c0_0] : memref<16x16xf32, #tpu.memory_space<vmem>>, vector<16x16xf32>
    %c0_1 = arith.constant 0 : index
    %c0_2 = arith.constant 0 : index
    %1 = vector.load %arg2[%c0_1, %c0_2] : memref<16x128xf32, #tpu.memory_space<vmem>>, vector<16x128xf32>
    %c0_3 = arith.constant 0 : index
    %c0_4 = arith.constant 0 : index
    %2 = vector.load %arg3[%c0_3, %c0_4] : memref<32x128xf32, #tpu.memory_space<vmem>>, vector<32x128xf32>
    %c0_5 = arith.constant 0 : index
    %c0_6 = arith.constant 0 : index
    %3 = vector.load %arg4[%c0_5, %c0_6] : memref<1x128xf32, #tpu.memory_space<vmem>>, vector<1x128xf32>
    %cst = arith.constant dense<0.000000e+00> : vector<16x128xf32>
    %4 = tpu.matmul %0, %1, %cst {dimension_numbers = #tpu.dot_dimension_numbers<[1], [0], [0], [1], [0, 0, 1, 1], [], []>} : vector<16x16xf32>, vector<16x128xf32>, vector<16x128xf32> -> vector<16x128xf32>
    %5 = vector.broadcast %3 : vector<1x128xf32> to vector<16x128xf32>
    %6 = arith.addf %4, %5 : vector<16x128xf32>
    %cst_7 = arith.constant 0.000000e+00 : f32
    %7 = vector.broadcast %cst_7 : f32 to vector<2x32xf32>
    %cst_8 = arith.constant 0.000000e+00 : f32
    %8 = vector.broadcast %cst_8 : f32 to vector<2x32xf32>
    %9 = vector.extract_strided_slice %6 {offsets = [0, 0], sizes = [2, 128], strides = [1, 1]} : vector<16x128xf32> to vector<2x128xf32>
    %cst_9 = arith.constant dense<0.000000e+00> : vector<2x128xf32>
    %10 = tpu.matmul %7, %2, %cst_9 {dimension_numbers = #tpu.dot_dimension_numbers<[1], [0], [0], [1], [0, 0, 1, 1], [], []>} : vector<2x32xf32>, vector<32x128xf32>, vector<2x128xf32> -> vector<2x128xf32>
    %11 = arith.addf %9, %10 : vector<2x128xf32>
    %12 = arith.negf %11 : vector<2x128xf32>
    %13 = math.exp %12 : vector<2x128xf32>
    %cst_10 = arith.constant 1.000000e+00 : f32
    %14 = vector.broadcast %cst_10 : f32 to vector<2x128xf32>
    %15 = arith.addf %14, %13 : vector<2x128xf32>
    %16 = arith.divf %14, %15 : vector<2x128xf32>
    %17 = math.tanh %11 : vector<2x128xf32>
    %18 = vector.extract_strided_slice %16 {offsets = [0, 0], sizes = [2, 32], strides = [1, 1]} : vector<2x128xf32> to vector<2x32xf32>
    %19 = vector.extract_strided_slice %16 {offsets = [0, 32], sizes = [2, 32], strides = [1, 1]} : vector<2x128xf32> to vector<2x32xf32>
    %20 = vector.extract_strided_slice %17 {offsets = [0, 64], sizes = [2, 32], strides = [1, 1]} : vector<2x128xf32> to vector<2x32xf32>
    %21 = vector.extract_strided_slice %16 {offsets = [0, 96], sizes = [2, 32], strides = [1, 1]} : vector<2x128xf32> to vector<2x32xf32>
    %22 = arith.mulf %19, %8 : vector<2x32xf32>
    %23 = arith.mulf %18, %20 : vector<2x32xf32>
    %24 = arith.addf %22, %23 : vector<2x32xf32>
    %25 = math.tanh %24 : vector<2x32xf32>
    %26 = arith.mulf %21, %25 : vector<2x32xf32>
    %27 = vector.extract_strided_slice %6 {offsets = [2, 0], sizes = [2, 128], strides = [1, 1]} : vector<16x128xf32> to vector<2x128xf32>
    %cst_11 = arith.constant dense<0.000000e+00> : vector<2x128xf32>
    %28 = tpu.matmul %26, %2, %cst_11 {dimension_numbers = #tpu.dot_dimension_numbers<[1], [0], [0], [1], [0, 0, 1, 1], [], []>} : vector<2x32xf32>, vector<32x128xf32>, vector<2x128xf32> -> vector<2x128xf32>
    %29 = arith.addf %27, %28 : vector<2x128xf32>
    %30 = arith.negf %29 : vector<2x128xf32>
    %31 = math.exp %30 : vector<2x128xf32>
    %cst_12 = arith.constant 1.000000e+00 : f32
    %32 = vector.broadcast %cst_12 : f32 to vector<2x128xf32>
    %33 = arith.addf %32, %31 : vector<2x128xf32>
    %34 = arith.divf %32, %33 : vector<2x128xf32>
    %35 = math.tanh %29 : vector<2x128xf32>
    %36 = vector.extract_strided_slice %34 {offsets = [0, 0], sizes = [2, 32], strides = [1, 1]} : vector<2x128xf32> to vector<2x32xf32>
    %37 = vector.extract_strided_slice %34 {offsets = [0, 32], sizes = [2, 32], strides = [1, 1]} : vector<2x128xf32> to vector<2x32xf32>
    %38 = vector.extract_strided_slice %35 {offsets = [0, 64], sizes = [2, 32], strides = [1, 1]} : vector<2x128xf32> to vector<2x32xf32>
    %39 = vector.extract_strided_slice %34 {offsets = [0, 96], sizes = [2, 32], strides = [1, 1]} : vector<2x128xf32> to vector<2x32xf32>
    %40 = arith.mulf %37, %24 : vector<2x32xf32>
    %41 = arith.mulf %36, %38 : vector<2x32xf32>
    %42 = arith.addf %40, %41 : vector<2x32xf32>
    %43 = math.tanh %42 : vector<2x32xf32>
    %44 = arith.mulf %39, %43 : vector<2x32xf32>
    %45 = vector.extract_strided_slice %6 {offsets = [4, 0], sizes = [2, 128], strides = [1, 1]} : vector<16x128xf32> to vector<2x128xf32>
    %cst_13 = arith.constant dense<0.000000e+00> : vector<2x128xf32>
    %46 = tpu.matmul %44, %2, %cst_13 {dimension_numbers = #tpu.dot_dimension_numbers<[1], [0], [0], [1], [0, 0, 1, 1], [], []>} : vector<2x32xf32>, vector<32x128xf32>, vector<2x128xf32> -> vector<2x128xf32>
    %47 = arith.addf %45, %46 : vector<2x128xf32>
    %48 = arith.negf %47 : vector<2x128xf32>
    %49 = math.exp %48 : vector<2x128xf32>
    %cst_14 = arith.constant 1.000000e+00 : f32
    %50 = vector.broadcast %cst_14 : f32 to vector<2x128xf32>
    %51 = arith.addf %50, %49 : vector<2x128xf32>
    %52 = arith.divf %50, %51 : vector<2x128xf32>
    %53 = math.tanh %47 : vector<2x128xf32>
    %54 = vector.extract_strided_slice %52 {offsets = [0, 0], sizes = [2, 32], strides = [1, 1]} : vector<2x128xf32> to vector<2x32xf32>
    %55 = vector.extract_strided_slice %52 {offsets = [0, 32], sizes = [2, 32], strides = [1, 1]} : vector<2x128xf32> to vector<2x32xf32>
    %56 = vector.extract_strided_slice %53 {offsets = [0, 64], sizes = [2, 32], strides = [1, 1]} : vector<2x128xf32> to vector<2x32xf32>
    %57 = vector.extract_strided_slice %52 {offsets = [0, 96], sizes = [2, 32], strides = [1, 1]} : vector<2x128xf32> to vector<2x32xf32>
    %58 = arith.mulf %55, %42 : vector<2x32xf32>
    %59 = arith.mulf %54, %56 : vector<2x32xf32>
    %60 = arith.addf %58, %59 : vector<2x32xf32>
    %61 = math.tanh %60 : vector<2x32xf32>
    %62 = arith.mulf %57, %61 : vector<2x32xf32>
    %63 = vector.extract_strided_slice %6 {offsets = [6, 0], sizes = [2, 128], strides = [1, 1]} : vector<16x128xf32> to vector<2x128xf32>
    %cst_15 = arith.constant dense<0.000000e+00> : vector<2x128xf32>
    %64 = tpu.matmul %62, %2, %cst_15 {dimension_numbers = #tpu.dot_dimension_numbers<[1], [0], [0], [1], [0, 0, 1, 1], [], []>} : vector<2x32xf32>, vector<32x128xf32>, vector<2x128xf32> -> vector<2x128xf32>
    %65 = arith.addf %63, %64 : vector<2x128xf32>
    %66 = arith.negf %65 : vector<2x128xf32>
    %67 = math.exp %66 : vector<2x128xf32>
    %cst_16 = arith.constant 1.000000e+00 : f32
    %68 = vector.broadcast %cst_16 : f32 to vector<2x128xf32>
    %69 = arith.addf %68, %67 : vector<2x128xf32>
    %70 = arith.divf %68, %69 : vector<2x128xf32>
    %71 = math.tanh %65 : vector<2x128xf32>
    %72 = vector.extract_strided_slice %70 {offsets = [0, 0], sizes = [2, 32], strides = [1, 1]} : vector<2x128xf32> to vector<2x32xf32>
    %73 = vector.extract_strided_slice %70 {offsets = [0, 32], sizes = [2, 32], strides = [1, 1]} : vector<2x128xf32> to vector<2x32xf32>
    %74 = vector.extract_strided_slice %71 {offsets = [0, 64], sizes = [2, 32], strides = [1, 1]} : vector<2x128xf32> to vector<2x32xf32>
    %75 = vector.extract_strided_slice %70 {offsets = [0, 96], sizes = [2, 32], strides = [1, 1]} : vector<2x128xf32> to vector<2x32xf32>
    %76 = arith.mulf %73, %60 : vector<2x32xf32>
    %77 = arith.mulf %72, %74 : vector<2x32xf32>
    %78 = arith.addf %76, %77 : vector<2x32xf32>
    %79 = math.tanh %78 : vector<2x32xf32>
    %80 = arith.mulf %75, %79 : vector<2x32xf32>
    %81 = vector.extract_strided_slice %6 {offsets = [8, 0], sizes = [2, 128], strides = [1, 1]} : vector<16x128xf32> to vector<2x128xf32>
    %cst_17 = arith.constant dense<0.000000e+00> : vector<2x128xf32>
    %82 = tpu.matmul %80, %2, %cst_17 {dimension_numbers = #tpu.dot_dimension_numbers<[1], [0], [0], [1], [0, 0, 1, 1], [], []>} : vector<2x32xf32>, vector<32x128xf32>, vector<2x128xf32> -> vector<2x128xf32>
    %83 = arith.addf %81, %82 : vector<2x128xf32>
    %84 = arith.negf %83 : vector<2x128xf32>
    %85 = math.exp %84 : vector<2x128xf32>
    %cst_18 = arith.constant 1.000000e+00 : f32
    %86 = vector.broadcast %cst_18 : f32 to vector<2x128xf32>
    %87 = arith.addf %86, %85 : vector<2x128xf32>
    %88 = arith.divf %86, %87 : vector<2x128xf32>
    %89 = math.tanh %83 : vector<2x128xf32>
    %90 = vector.extract_strided_slice %88 {offsets = [0, 0], sizes = [2, 32], strides = [1, 1]} : vector<2x128xf32> to vector<2x32xf32>
    %91 = vector.extract_strided_slice %88 {offsets = [0, 32], sizes = [2, 32], strides = [1, 1]} : vector<2x128xf32> to vector<2x32xf32>
    %92 = vector.extract_strided_slice %89 {offsets = [0, 64], sizes = [2, 32], strides = [1, 1]} : vector<2x128xf32> to vector<2x32xf32>
    %93 = vector.extract_strided_slice %88 {offsets = [0, 96], sizes = [2, 32], strides = [1, 1]} : vector<2x128xf32> to vector<2x32xf32>
    %94 = arith.mulf %91, %78 : vector<2x32xf32>
    %95 = arith.mulf %90, %92 : vector<2x32xf32>
    %96 = arith.addf %94, %95 : vector<2x32xf32>
    %97 = math.tanh %96 : vector<2x32xf32>
    %98 = arith.mulf %93, %97 : vector<2x32xf32>
    %99 = vector.extract_strided_slice %6 {offsets = [10, 0], sizes = [2, 128], strides = [1, 1]} : vector<16x128xf32> to vector<2x128xf32>
    %cst_19 = arith.constant dense<0.000000e+00> : vector<2x128xf32>
    %100 = tpu.matmul %98, %2, %cst_19 {dimension_numbers = #tpu.dot_dimension_numbers<[1], [0], [0], [1], [0, 0, 1, 1], [], []>} : vector<2x32xf32>, vector<32x128xf32>, vector<2x128xf32> -> vector<2x128xf32>
    %101 = arith.addf %99, %100 : vector<2x128xf32>
    %102 = arith.negf %101 : vector<2x128xf32>
    %103 = math.exp %102 : vector<2x128xf32>
    %cst_20 = arith.constant 1.000000e+00 : f32
    %104 = vector.broadcast %cst_20 : f32 to vector<2x128xf32>
    %105 = arith.addf %104, %103 : vector<2x128xf32>
    %106 = arith.divf %104, %105 : vector<2x128xf32>
    %107 = math.tanh %101 : vector<2x128xf32>
    %108 = vector.extract_strided_slice %106 {offsets = [0, 0], sizes = [2, 32], strides = [1, 1]} : vector<2x128xf32> to vector<2x32xf32>
    %109 = vector.extract_strided_slice %106 {offsets = [0, 32], sizes = [2, 32], strides = [1, 1]} : vector<2x128xf32> to vector<2x32xf32>
    %110 = vector.extract_strided_slice %107 {offsets = [0, 64], sizes = [2, 32], strides = [1, 1]} : vector<2x128xf32> to vector<2x32xf32>
    %111 = vector.extract_strided_slice %106 {offsets = [0, 96], sizes = [2, 32], strides = [1, 1]} : vector<2x128xf32> to vector<2x32xf32>
    %112 = arith.mulf %109, %96 : vector<2x32xf32>
    %113 = arith.mulf %108, %110 : vector<2x32xf32>
    %114 = arith.addf %112, %113 : vector<2x32xf32>
    %115 = math.tanh %114 : vector<2x32xf32>
    %116 = arith.mulf %111, %115 : vector<2x32xf32>
    %117 = vector.extract_strided_slice %6 {offsets = [12, 0], sizes = [2, 128], strides = [1, 1]} : vector<16x128xf32> to vector<2x128xf32>
    %cst_21 = arith.constant dense<0.000000e+00> : vector<2x128xf32>
    %118 = tpu.matmul %116, %2, %cst_21 {dimension_numbers = #tpu.dot_dimension_numbers<[1], [0], [0], [1], [0, 0, 1, 1], [], []>} : vector<2x32xf32>, vector<32x128xf32>, vector<2x128xf32> -> vector<2x128xf32>
    %119 = arith.addf %117, %118 : vector<2x128xf32>
    %120 = arith.negf %119 : vector<2x128xf32>
    %121 = math.exp %120 : vector<2x128xf32>
    %cst_22 = arith.constant 1.000000e+00 : f32
    %122 = vector.broadcast %cst_22 : f32 to vector<2x128xf32>
    %123 = arith.addf %122, %121 : vector<2x128xf32>
    %124 = arith.divf %122, %123 : vector<2x128xf32>
    %125 = math.tanh %119 : vector<2x128xf32>
    %126 = vector.extract_strided_slice %124 {offsets = [0, 0], sizes = [2, 32], strides = [1, 1]} : vector<2x128xf32> to vector<2x32xf32>
    %127 = vector.extract_strided_slice %124 {offsets = [0, 32], sizes = [2, 32], strides = [1, 1]} : vector<2x128xf32> to vector<2x32xf32>
    %128 = vector.extract_strided_slice %125 {offsets = [0, 64], sizes = [2, 32], strides = [1, 1]} : vector<2x128xf32> to vector<2x32xf32>
    %129 = vector.extract_strided_slice %124 {offsets = [0, 96], sizes = [2, 32], strides = [1, 1]} : vector<2x128xf32> to vector<2x32xf32>
    %130 = arith.mulf %127, %114 : vector<2x32xf32>
    %131 = arith.mulf %126, %128 : vector<2x32xf32>
    %132 = arith.addf %130, %131 : vector<2x32xf32>
    %133 = math.tanh %132 : vector<2x32xf32>
    %134 = arith.mulf %129, %133 : vector<2x32xf32>
    %135 = vector.extract_strided_slice %6 {offsets = [14, 0], sizes = [2, 128], strides = [1, 1]} : vector<16x128xf32> to vector<2x128xf32>
    %cst_23 = arith.constant dense<0.000000e+00> : vector<2x128xf32>
    %136 = tpu.matmul %134, %2, %cst_23 {dimension_numbers = #tpu.dot_dimension_numbers<[1], [0], [0], [1], [0, 0, 1, 1], [], []>} : vector<2x32xf32>, vector<32x128xf32>, vector<2x128xf32> -> vector<2x128xf32>
    %137 = arith.addf %135, %136 : vector<2x128xf32>
    %138 = arith.negf %137 : vector<2x128xf32>
    %139 = math.exp %138 : vector<2x128xf32>
    %cst_24 = arith.constant 1.000000e+00 : f32
    %140 = vector.broadcast %cst_24 : f32 to vector<2x128xf32>
    %141 = arith.addf %140, %139 : vector<2x128xf32>
    %142 = arith.divf %140, %141 : vector<2x128xf32>
    %143 = math.tanh %137 : vector<2x128xf32>
    %144 = vector.extract_strided_slice %142 {offsets = [0, 0], sizes = [2, 32], strides = [1, 1]} : vector<2x128xf32> to vector<2x32xf32>
    %145 = vector.extract_strided_slice %142 {offsets = [0, 32], sizes = [2, 32], strides = [1, 1]} : vector<2x128xf32> to vector<2x32xf32>
    %146 = vector.extract_strided_slice %143 {offsets = [0, 64], sizes = [2, 32], strides = [1, 1]} : vector<2x128xf32> to vector<2x32xf32>
    %147 = vector.extract_strided_slice %142 {offsets = [0, 96], sizes = [2, 32], strides = [1, 1]} : vector<2x128xf32> to vector<2x32xf32>
    %148 = arith.mulf %145, %132 : vector<2x32xf32>
    %149 = arith.mulf %144, %146 : vector<2x32xf32>
    %150 = arith.addf %148, %149 : vector<2x32xf32>
    %151 = math.tanh %150 : vector<2x32xf32>
    %152 = arith.mulf %147, %151 : vector<2x32xf32>
    %153 = tpu.concatenate %26, %44, %62, %80, %98, %116, %134, %152 in 0 : vector<2x32xf32>, vector<2x32xf32>, vector<2x32xf32>, vector<2x32xf32>, vector<2x32xf32>, vector<2x32xf32>, vector<2x32xf32>, vector<2x32xf32> -> vector<16x32xf32>
    %c0_25 = arith.constant 0 : index
    %c0_26 = arith.constant 0 : index
    %154 = vector.load %arg5[%c0_25, %c0_26] : memref<32x128xf32, #tpu.memory_space<vmem>>, vector<32x128xf32>
    %c0_27 = arith.constant 0 : index
    %c0_28 = arith.constant 0 : index
    %155 = vector.load %arg6[%c0_27, %c0_28] : memref<32x128xf32, #tpu.memory_space<vmem>>, vector<32x128xf32>
    %c0_29 = arith.constant 0 : index
    %c0_30 = arith.constant 0 : index
    %156 = vector.load %arg7[%c0_29, %c0_30] : memref<1x128xf32, #tpu.memory_space<vmem>>, vector<1x128xf32>
    %cst_31 = arith.constant dense<0.000000e+00> : vector<16x128xf32>
    %157 = tpu.matmul %153, %154, %cst_31 {dimension_numbers = #tpu.dot_dimension_numbers<[1], [0], [0], [1], [0, 0, 1, 1], [], []>} : vector<16x32xf32>, vector<32x128xf32>, vector<16x128xf32> -> vector<16x128xf32>
    %158 = vector.broadcast %156 : vector<1x128xf32> to vector<16x128xf32>
    %159 = arith.addf %157, %158 : vector<16x128xf32>
    %cst_32 = arith.constant 0.000000e+00 : f32
    %160 = vector.broadcast %cst_32 : f32 to vector<2x32xf32>
    %cst_33 = arith.constant 0.000000e+00 : f32
    %161 = vector.broadcast %cst_33 : f32 to vector<2x32xf32>
    %162 = vector.extract_strided_slice %159 {offsets = [0, 0], sizes = [2, 128], strides = [1, 1]} : vector<16x128xf32> to vector<2x128xf32>
    %cst_34 = arith.constant dense<0.000000e+00> : vector<2x128xf32>
    %163 = tpu.matmul %160, %155, %cst_34 {dimension_numbers = #tpu.dot_dimension_numbers<[1], [0], [0], [1], [0, 0, 1, 1], [], []>} : vector<2x32xf32>, vector<32x128xf32>, vector<2x128xf32> -> vector<2x128xf32>
    %164 = arith.addf %162, %163 : vector<2x128xf32>
    %165 = arith.negf %164 : vector<2x128xf32>
    %166 = math.exp %165 : vector<2x128xf32>
    %cst_35 = arith.constant 1.000000e+00 : f32
    %167 = vector.broadcast %cst_35 : f32 to vector<2x128xf32>
    %168 = arith.addf %167, %166 : vector<2x128xf32>
    %169 = arith.divf %167, %168 : vector<2x128xf32>
    %170 = math.tanh %164 : vector<2x128xf32>
    %171 = vector.extract_strided_slice %169 {offsets = [0, 0], sizes = [2, 32], strides = [1, 1]} : vector<2x128xf32> to vector<2x32xf32>
    %172 = vector.extract_strided_slice %169 {offsets = [0, 32], sizes = [2, 32], strides = [1, 1]} : vector<2x128xf32> to vector<2x32xf32>
    %173 = vector.extract_strided_slice %170 {offsets = [0, 64], sizes = [2, 32], strides = [1, 1]} : vector<2x128xf32> to vector<2x32xf32>
    %174 = vector.extract_strided_slice %169 {offsets = [0, 96], sizes = [2, 32], strides = [1, 1]} : vector<2x128xf32> to vector<2x32xf32>
    %175 = arith.mulf %172, %161 : vector<2x32xf32>
    %176 = arith.mulf %171, %173 : vector<2x32xf32>
    %177 = arith.addf %175, %176 : vector<2x32xf32>
    %178 = math.tanh %177 : vector<2x32xf32>
    %179 = arith.mulf %174, %178 : vector<2x32xf32>
    %180 = vector.extract_strided_slice %159 {offsets = [2, 0], sizes = [2, 128], strides = [1, 1]} : vector<16x128xf32> to vector<2x128xf32>
    %cst_36 = arith.constant dense<0.000000e+00> : vector<2x128xf32>
    %181 = tpu.matmul %179, %155, %cst_36 {dimension_numbers = #tpu.dot_dimension_numbers<[1], [0], [0], [1], [0, 0, 1, 1], [], []>} : vector<2x32xf32>, vector<32x128xf32>, vector<2x128xf32> -> vector<2x128xf32>
    %182 = arith.addf %180, %181 : vector<2x128xf32>
    %183 = arith.negf %182 : vector<2x128xf32>
    %184 = math.exp %183 : vector<2x128xf32>
    %cst_37 = arith.constant 1.000000e+00 : f32
    %185 = vector.broadcast %cst_37 : f32 to vector<2x128xf32>
    %186 = arith.addf %185, %184 : vector<2x128xf32>
    %187 = arith.divf %185, %186 : vector<2x128xf32>
    %188 = math.tanh %182 : vector<2x128xf32>
    %189 = vector.extract_strided_slice %187 {offsets = [0, 0], sizes = [2, 32], strides = [1, 1]} : vector<2x128xf32> to vector<2x32xf32>
    %190 = vector.extract_strided_slice %187 {offsets = [0, 32], sizes = [2, 32], strides = [1, 1]} : vector<2x128xf32> to vector<2x32xf32>
    %191 = vector.extract_strided_slice %188 {offsets = [0, 64], sizes = [2, 32], strides = [1, 1]} : vector<2x128xf32> to vector<2x32xf32>
    %192 = vector.extract_strided_slice %187 {offsets = [0, 96], sizes = [2, 32], strides = [1, 1]} : vector<2x128xf32> to vector<2x32xf32>
    %193 = arith.mulf %190, %177 : vector<2x32xf32>
    %194 = arith.mulf %189, %191 : vector<2x32xf32>
    %195 = arith.addf %193, %194 : vector<2x32xf32>
    %196 = math.tanh %195 : vector<2x32xf32>
    %197 = arith.mulf %192, %196 : vector<2x32xf32>
    %198 = vector.extract_strided_slice %159 {offsets = [4, 0], sizes = [2, 128], strides = [1, 1]} : vector<16x128xf32> to vector<2x128xf32>
    %cst_38 = arith.constant dense<0.000000e+00> : vector<2x128xf32>
    %199 = tpu.matmul %197, %155, %cst_38 {dimension_numbers = #tpu.dot_dimension_numbers<[1], [0], [0], [1], [0, 0, 1, 1], [], []>} : vector<2x32xf32>, vector<32x128xf32>, vector<2x128xf32> -> vector<2x128xf32>
    %200 = arith.addf %198, %199 : vector<2x128xf32>
    %201 = arith.negf %200 : vector<2x128xf32>
    %202 = math.exp %201 : vector<2x128xf32>
    %cst_39 = arith.constant 1.000000e+00 : f32
    %203 = vector.broadcast %cst_39 : f32 to vector<2x128xf32>
    %204 = arith.addf %203, %202 : vector<2x128xf32>
    %205 = arith.divf %203, %204 : vector<2x128xf32>
    %206 = math.tanh %200 : vector<2x128xf32>
    %207 = vector.extract_strided_slice %205 {offsets = [0, 0], sizes = [2, 32], strides = [1, 1]} : vector<2x128xf32> to vector<2x32xf32>
    %208 = vector.extract_strided_slice %205 {offsets = [0, 32], sizes = [2, 32], strides = [1, 1]} : vector<2x128xf32> to vector<2x32xf32>
    %209 = vector.extract_strided_slice %206 {offsets = [0, 64], sizes = [2, 32], strides = [1, 1]} : vector<2x128xf32> to vector<2x32xf32>
    %210 = vector.extract_strided_slice %205 {offsets = [0, 96], sizes = [2, 32], strides = [1, 1]} : vector<2x128xf32> to vector<2x32xf32>
    %211 = arith.mulf %208, %195 : vector<2x32xf32>
    %212 = arith.mulf %207, %209 : vector<2x32xf32>
    %213 = arith.addf %211, %212 : vector<2x32xf32>
    %214 = math.tanh %213 : vector<2x32xf32>
    %215 = arith.mulf %210, %214 : vector<2x32xf32>
    %216 = vector.extract_strided_slice %159 {offsets = [6, 0], sizes = [2, 128], strides = [1, 1]} : vector<16x128xf32> to vector<2x128xf32>
    %cst_40 = arith.constant dense<0.000000e+00> : vector<2x128xf32>
    %217 = tpu.matmul %215, %155, %cst_40 {dimension_numbers = #tpu.dot_dimension_numbers<[1], [0], [0], [1], [0, 0, 1, 1], [], []>} : vector<2x32xf32>, vector<32x128xf32>, vector<2x128xf32> -> vector<2x128xf32>
    %218 = arith.addf %216, %217 : vector<2x128xf32>
    %219 = arith.negf %218 : vector<2x128xf32>
    %220 = math.exp %219 : vector<2x128xf32>
    %cst_41 = arith.constant 1.000000e+00 : f32
    %221 = vector.broadcast %cst_41 : f32 to vector<2x128xf32>
    %222 = arith.addf %221, %220 : vector<2x128xf32>
    %223 = arith.divf %221, %222 : vector<2x128xf32>
    %224 = math.tanh %218 : vector<2x128xf32>
    %225 = vector.extract_strided_slice %223 {offsets = [0, 0], sizes = [2, 32], strides = [1, 1]} : vector<2x128xf32> to vector<2x32xf32>
    %226 = vector.extract_strided_slice %223 {offsets = [0, 32], sizes = [2, 32], strides = [1, 1]} : vector<2x128xf32> to vector<2x32xf32>
    %227 = vector.extract_strided_slice %224 {offsets = [0, 64], sizes = [2, 32], strides = [1, 1]} : vector<2x128xf32> to vector<2x32xf32>
    %228 = vector.extract_strided_slice %223 {offsets = [0, 96], sizes = [2, 32], strides = [1, 1]} : vector<2x128xf32> to vector<2x32xf32>
    %229 = arith.mulf %226, %213 : vector<2x32xf32>
    %230 = arith.mulf %225, %227 : vector<2x32xf32>
    %231 = arith.addf %229, %230 : vector<2x32xf32>
    %232 = math.tanh %231 : vector<2x32xf32>
    %233 = arith.mulf %228, %232 : vector<2x32xf32>
    %234 = vector.extract_strided_slice %159 {offsets = [8, 0], sizes = [2, 128], strides = [1, 1]} : vector<16x128xf32> to vector<2x128xf32>
    %cst_42 = arith.constant dense<0.000000e+00> : vector<2x128xf32>
    %235 = tpu.matmul %233, %155, %cst_42 {dimension_numbers = #tpu.dot_dimension_numbers<[1], [0], [0], [1], [0, 0, 1, 1], [], []>} : vector<2x32xf32>, vector<32x128xf32>, vector<2x128xf32> -> vector<2x128xf32>
    %236 = arith.addf %234, %235 : vector<2x128xf32>
    %237 = arith.negf %236 : vector<2x128xf32>
    %238 = math.exp %237 : vector<2x128xf32>
    %cst_43 = arith.constant 1.000000e+00 : f32
    %239 = vector.broadcast %cst_43 : f32 to vector<2x128xf32>
    %240 = arith.addf %239, %238 : vector<2x128xf32>
    %241 = arith.divf %239, %240 : vector<2x128xf32>
    %242 = math.tanh %236 : vector<2x128xf32>
    %243 = vector.extract_strided_slice %241 {offsets = [0, 0], sizes = [2, 32], strides = [1, 1]} : vector<2x128xf32> to vector<2x32xf32>
    %244 = vector.extract_strided_slice %241 {offsets = [0, 32], sizes = [2, 32], strides = [1, 1]} : vector<2x128xf32> to vector<2x32xf32>
    %245 = vector.extract_strided_slice %242 {offsets = [0, 64], sizes = [2, 32], strides = [1, 1]} : vector<2x128xf32> to vector<2x32xf32>
    %246 = vector.extract_strided_slice %241 {offsets = [0, 96], sizes = [2, 32], strides = [1, 1]} : vector<2x128xf32> to vector<2x32xf32>
    %247 = arith.mulf %244, %231 : vector<2x32xf32>
    %248 = arith.mulf %243, %245 : vector<2x32xf32>
    %249 = arith.addf %247, %248 : vector<2x32xf32>
    %250 = math.tanh %249 : vector<2x32xf32>
    %251 = arith.mulf %246, %250 : vector<2x32xf32>
    %252 = vector.extract_strided_slice %159 {offsets = [10, 0], sizes = [2, 128], strides = [1, 1]} : vector<16x128xf32> to vector<2x128xf32>
    %cst_44 = arith.constant dense<0.000000e+00> : vector<2x128xf32>
    %253 = tpu.matmul %251, %155, %cst_44 {dimension_numbers = #tpu.dot_dimension_numbers<[1], [0], [0], [1], [0, 0, 1, 1], [], []>} : vector<2x32xf32>, vector<32x128xf32>, vector<2x128xf32> -> vector<2x128xf32>
    %254 = arith.addf %252, %253 : vector<2x128xf32>
    %255 = arith.negf %254 : vector<2x128xf32>
    %256 = math.exp %255 : vector<2x128xf32>
    %cst_45 = arith.constant 1.000000e+00 : f32
    %257 = vector.broadcast %cst_45 : f32 to vector<2x128xf32>
    %258 = arith.addf %257, %256 : vector<2x128xf32>
    %259 = arith.divf %257, %258 : vector<2x128xf32>
    %260 = math.tanh %254 : vector<2x128xf32>
    %261 = vector.extract_strided_slice %259 {offsets = [0, 0], sizes = [2, 32], strides = [1, 1]} : vector<2x128xf32> to vector<2x32xf32>
    %262 = vector.extract_strided_slice %259 {offsets = [0, 32], sizes = [2, 32], strides = [1, 1]} : vector<2x128xf32> to vector<2x32xf32>
    %263 = vector.extract_strided_slice %260 {offsets = [0, 64], sizes = [2, 32], strides = [1, 1]} : vector<2x128xf32> to vector<2x32xf32>
    %264 = vector.extract_strided_slice %259 {offsets = [0, 96], sizes = [2, 32], strides = [1, 1]} : vector<2x128xf32> to vector<2x32xf32>
    %265 = arith.mulf %262, %249 : vector<2x32xf32>
    %266 = arith.mulf %261, %263 : vector<2x32xf32>
    %267 = arith.addf %265, %266 : vector<2x32xf32>
    %268 = math.tanh %267 : vector<2x32xf32>
    %269 = arith.mulf %264, %268 : vector<2x32xf32>
    %270 = vector.extract_strided_slice %159 {offsets = [12, 0], sizes = [2, 128], strides = [1, 1]} : vector<16x128xf32> to vector<2x128xf32>
    %cst_46 = arith.constant dense<0.000000e+00> : vector<2x128xf32>
    %271 = tpu.matmul %269, %155, %cst_46 {dimension_numbers = #tpu.dot_dimension_numbers<[1], [0], [0], [1], [0, 0, 1, 1], [], []>} : vector<2x32xf32>, vector<32x128xf32>, vector<2x128xf32> -> vector<2x128xf32>
    %272 = arith.addf %270, %271 : vector<2x128xf32>
    %273 = arith.negf %272 : vector<2x128xf32>
    %274 = math.exp %273 : vector<2x128xf32>
    %cst_47 = arith.constant 1.000000e+00 : f32
    %275 = vector.broadcast %cst_47 : f32 to vector<2x128xf32>
    %276 = arith.addf %275, %274 : vector<2x128xf32>
    %277 = arith.divf %275, %276 : vector<2x128xf32>
    %278 = math.tanh %272 : vector<2x128xf32>
    %279 = vector.extract_strided_slice %277 {offsets = [0, 0], sizes = [2, 32], strides = [1, 1]} : vector<2x128xf32> to vector<2x32xf32>
    %280 = vector.extract_strided_slice %277 {offsets = [0, 32], sizes = [2, 32], strides = [1, 1]} : vector<2x128xf32> to vector<2x32xf32>
    %281 = vector.extract_strided_slice %278 {offsets = [0, 64], sizes = [2, 32], strides = [1, 1]} : vector<2x128xf32> to vector<2x32xf32>
    %282 = vector.extract_strided_slice %277 {offsets = [0, 96], sizes = [2, 32], strides = [1, 1]} : vector<2x128xf32> to vector<2x32xf32>
    %283 = arith.mulf %280, %267 : vector<2x32xf32>
    %284 = arith.mulf %279, %281 : vector<2x32xf32>
    %285 = arith.addf %283, %284 : vector<2x32xf32>
    %286 = math.tanh %285 : vector<2x32xf32>
    %287 = arith.mulf %282, %286 : vector<2x32xf32>
    %288 = vector.extract_strided_slice %159 {offsets = [14, 0], sizes = [2, 128], strides = [1, 1]} : vector<16x128xf32> to vector<2x128xf32>
    %cst_48 = arith.constant dense<0.000000e+00> : vector<2x128xf32>
    %289 = tpu.matmul %287, %155, %cst_48 {dimension_numbers = #tpu.dot_dimension_numbers<[1], [0], [0], [1], [0, 0, 1, 1], [], []>} : vector<2x32xf32>, vector<32x128xf32>, vector<2x128xf32> -> vector<2x128xf32>
    %290 = arith.addf %288, %289 : vector<2x128xf32>
    %291 = arith.negf %290 : vector<2x128xf32>
    %292 = math.exp %291 : vector<2x128xf32>
    %cst_49 = arith.constant 1.000000e+00 : f32
    %293 = vector.broadcast %cst_49 : f32 to vector<2x128xf32>
    %294 = arith.addf %293, %292 : vector<2x128xf32>
    %295 = arith.divf %293, %294 : vector<2x128xf32>
    %296 = math.tanh %290 : vector<2x128xf32>
    %297 = vector.extract_strided_slice %295 {offsets = [0, 0], sizes = [2, 32], strides = [1, 1]} : vector<2x128xf32> to vector<2x32xf32>
    %298 = vector.extract_strided_slice %295 {offsets = [0, 32], sizes = [2, 32], strides = [1, 1]} : vector<2x128xf32> to vector<2x32xf32>
    %299 = vector.extract_strided_slice %296 {offsets = [0, 64], sizes = [2, 32], strides = [1, 1]} : vector<2x128xf32> to vector<2x32xf32>
    %300 = vector.extract_strided_slice %295 {offsets = [0, 96], sizes = [2, 32], strides = [1, 1]} : vector<2x128xf32> to vector<2x32xf32>
    %301 = arith.mulf %298, %285 : vector<2x32xf32>
    %302 = arith.mulf %297, %299 : vector<2x32xf32>
    %303 = arith.addf %301, %302 : vector<2x32xf32>
    %304 = math.tanh %303 : vector<2x32xf32>
    %305 = arith.mulf %300, %304 : vector<2x32xf32>
    %306 = tpu.concatenate %179, %197, %215, %233, %251, %269, %287, %305 in 0 : vector<2x32xf32>, vector<2x32xf32>, vector<2x32xf32>, vector<2x32xf32>, vector<2x32xf32>, vector<2x32xf32>, vector<2x32xf32>, vector<2x32xf32> -> vector<16x32xf32>
    %c0_50 = arith.constant 0 : index
    %c0_51 = arith.constant 0 : index
    %307 = vector.load %arg8[%c0_50, %c0_51] : memref<16x32xf32, #tpu.memory_space<vmem>>, vector<16x32xf32>
    tpu.vector_store %arg8[%c0_50, %c0_51], %306 {strides = array<i32>} : memref<16x32xf32, #tpu.memory_space<vmem>>, vector<16x32xf32>,
    return
  }
  func.func @transform_0(%arg0: i32) -> (i32, i32) {
    %c0_i32 = arith.constant 0 : i32
    %c0_i32_0 = arith.constant 0 : i32
    %c0_i32_1 = arith.constant 0 : i32
    return %c0_i32, %c0_i32_0 : i32, i32
  }
  func.func @transform_1(%arg0: i32) -> (i32, i32) {
    %c0_i32 = arith.constant 0 : i32
    %c0_i32_0 = arith.constant 0 : i32
    %c0_i32_1 = arith.constant 0 : i32
    return %c0_i32, %c0_i32_0 : i32, i32
  }
  func.func @transform_2(%arg0: i32) -> (i32, i32) {
    %c0_i32 = arith.constant 0 : i32
    %c0_i32_0 = arith.constant 0 : i32
    %c0_i32_1 = arith.constant 0 : i32
    return %c0_i32, %c0_i32_0 : i32, i32
  }
  func.func @transform_3(%arg0: i32) -> (i32, i32) {
    %c0_i32 = arith.constant 0 : i32
    %c0_i32_0 = arith.constant 0 : i32
    %c0_i32_1 = arith.constant 0 : i32
    return %c0_i32, %c0_i32_0 : i32, i32
  }
  func.func @transform_4(%arg0: i32) -> (i32, i32) {
    %c0_i32 = arith.constant 0 : i32
    %c0_i32_0 = arith.constant 0 : i32
    %c0_i32_1 = arith.constant 0 : i32
    return %c0_i32, %c0_i32_0 : i32, i32
  }
  func.func @transform_5(%arg0: i32) -> (i32, i32) {
    %c0_i32 = arith.constant 0 : i32
    %c0_i32_0 = arith.constant 0 : i32
    %c0_i32_1 = arith.constant 0 : i32
    return %c0_i32, %c0_i32_0 : i32, i32
  }
  func.func @transform_6(%arg0: i32) -> (i32, i32) {
    %c0_i32 = arith.constant 0 : i32
    %c0_i32_0 = arith.constant 0 : i32
    %c0_i32_1 = arith.constant 0 : i32
    return %c0_i32, %c0_i32_0 : i32, i32
  }
  func.func @transform_7(%arg0: i32) -> (i32, i32) {
    %c0_i32 = arith.constant 0 : i32
    %c0_i32_0 = arith.constant 0 : i32
    %c0_i32_1 = arith.constant 0 : i32
    return %c0_i32, %c0_i32_0 : i32, i32
  }
}

</mosaic_0001>

<llo_original>
// kernel: tpu_custom_call.1
$region0: #{tpu_custom_call.1}
  #allocation0 [shape = 'u32[]', space=smem, size = 0x4, offset = 0x4, fixed_abs, tag = 'smem constant byte address 0x4 - core index']
  #allocation1 [shape = 'u32[144,128]{1,0:T(1,128)}', space=vmem, size = 0x12000, scoped, tag = 'internal scratch']
  %s0 = inlined_call_operand.hbm [shape: f32[16,16], index: 0, kind: input, shape index: {}]
  %s1 = inlined_call_operand.hbm [shape: f32[16,128], index: 1, kind: input, shape index: {}]
  %s2 = inlined_call_operand.hbm [shape: f32[32,128], index: 2, kind: input, shape index: {}]
  %s3 = inlined_call_operand.vmem [shape: f32[1,128], index: 3, kind: input, shape index: {}]
  %s4 = inlined_call_operand.hbm [shape: f32[32,128], index: 4, kind: input, shape index: {}]
  %s5 = inlined_call_operand.hbm [shape: f32[32,128], index: 5, kind: input, shape index: {}]
  %s6 = inlined_call_operand.vmem [shape: f32[1,128], index: 6, kind: input, shape index: {}]
  %s7 = inlined_call_operand.hbm [shape: f32[16,32], index: 7, kind: output, shape index: {}]
  %s8 = sld [smem:[#allocation0]]
  $region58: #{tpu_custom_call.1} parent=0
    _
  %s10 = ssub.s32 1, %s8
  %s11 = scalar_select 0, %s10, %s8
  $region1: #{tpu_custom_call.1} parent=0
    #allocation2 [shape = 'u8[8192]{0}', space=vmem, size = 0x2000, scoped, tag = 'input window, operand 0, single buffered']
    #allocation3 [shape = 's32[1]{0}', space=sflag, size = 0x4, scoped, tag = 'scoped memory for tpu_custom_call.1']
    #allocation4 [shape = 's32[1]{0}', space=sflag, size = 0x4, scoped, tag = 'scoped memory for tpu_custom_call.1']
    #allocation5 [shape = 'u8[8192]{0}', space=vmem, size = 0x2000, scoped, tag = 'input window, operand 1, single buffered']
    #allocation6 [shape = 's32[1]{0}', space=sflag, size = 0x4, scoped, tag = 'scoped memory for tpu_custom_call.1']
    #allocation7 [shape = 'u8[16384]{0}', space=vmem, size = 0x4000, scoped, tag = 'input window, operand 2, single buffered']
    #allocation8 [shape = 'u8[16384]{0}', space=vmem, size = 0x4000, scoped, tag = 'input window, operand 4, single buffered']
    #allocation9 [shape = 's32[1]{0}', space=sflag, size = 0x4, scoped, tag = 'scoped memory for tpu_custom_call.1']
    #allocation10 [shape = 'u8[16384]{0}', space=vmem, size = 0x4000, scoped, tag = 'input window, operand 5, single buffered']
    #allocation11 [shape = 'u8[8192]{0}', space=vmem, size = 0x2000, scoped, tag = 'output window, operand 0, single buffered']
    %12 = vsyncpa [#allocation3], 0
    %13 = vsyncpa [#allocation6], 0
    %14 = vsyncpa [#allocation9], 0
    %15 = vsyncpa [#allocation4], 0
    // Predicated region
    $region2: #{tpu_custom_call.1} parent=1 // pred_check
      _
    $region3: #{tpu_custom_call.1} parent=1 // pred_check_branch
      %17 = sbr.rel (0) target = $region5
    $region4: #{tpu_custom_call.1} parent=1 // pred_region
      %s19 = ssub.s32 256, 256
      %20 = vsyncadd [#allocation3], %s19
      %s21 = sshll.u32 [#allocation2], 4
      %s22 = int_to_ptr.vmem [resolvable:$true] %s21
      %27 = dma.hbm_to_vmem [thread:$0]  %s0, 256, %s22, [#allocation3], 128, 128, 8
    $region5: #{tpu_custom_call.1} parent=1 // pred_fallthru
      _
    // Predicated region
    $region6: #{tpu_custom_call.1} parent=1 // pred_check
      _
    $region7: #{tpu_custom_call.1} parent=1 // pred_check_branch
      %29 = sbr.rel (0) target = $region9
    $region8: #{tpu_custom_call.1} parent=1 // pred_region
      %s31 = ssub.s32 256, 256
      %32 = vsyncadd [#allocation6], %s31
      %s33 = sshll.u32 [#allocation5], 4
      %s34 = int_to_ptr.vmem [resolvable:$true] %s33
      %39 = dma.hbm_to_vmem [thread:$0]  %s1, 256, %s34, [#allocation6], 128, 128, 8
    $region9: #{tpu_custom_call.1} parent=1 // pred_fallthru
      _
    // Predicated region
    $region10: #{tpu_custom_call.1} parent=1 // pred_check
      _
    $region11: #{tpu_custom_call.1} parent=1 // pred_check_branch
      %41 = sbr.rel (0) target = $region13
    $region12: #{tpu_custom_call.1} parent=1 // pred_region
      %s43 = ssub.s32 512, 512
      %44 = vsyncadd [#allocation6], %s43
      %s45 = sshll.u32 [#allocation7], 4
      %s46 = int_to_ptr.vmem [resolvable:$true] %s45
      %51 = dma.hbm_to_vmem [thread:$0]  %s2, 512, %s46, [#allocation6], 128, 128, 8
    $region13: #{tpu_custom_call.1} parent=1 // pred_fallthru
      _
    // Predicated region
    $region14: #{tpu_custom_call.1} parent=1 // pred_check
      _
    $region15: #{tpu_custom_call.1} parent=1 // pred_check_branch
      %53 = sbr.rel (0) target = $region17
    $region16: #{tpu_custom_call.1} parent=1 // pred_region
      _
    $region17: #{tpu_custom_call.1} parent=1 // pred_fallthru
      _
    // Predicated region
    $region18: #{tpu_custom_call.1} parent=1 // pred_check
      _
    $region19: #{tpu_custom_call.1} parent=1 // pred_check_branch
      %55 = sbr.rel (0) target = $region21
    $region20: #{tpu_custom_call.1} parent=1 // pred_region
      %s57 = ssub.s32 512, 512
      %58 = vsyncadd [#allocation9], %s57
      %s59 = sshll.u32 [#allocation8], 4
      %s60 = int_to_ptr.vmem [resolvable:$true] %s59
      %65 = dma.hbm_to_vmem [thread:$0]  %s4, 512, %s60, [#allocation9], 128, 128, 8
    $region21: #{tpu_custom_call.1} parent=1 // pred_fallthru
      _
    // Predicated region
    $region22: #{tpu_custom_call.1} parent=1 // pred_check
      _
    $region23: #{tpu_custom_call.1} parent=1 // pred_check_branch
      %67 = sbr.rel (0) target = $region25
    $region24: #{tpu_custom_call.1} parent=1 // pred_region
      %s69 = ssub.s32 512, 512
      %70 = vsyncadd [#allocation9], %s69
      %s71 = sshll.u32 [#allocation10], 4
      %s72 = int_to_ptr.vmem [resolvable:$true] %s71
      %77 = dma.hbm_to_vmem [thread:$0]  %s5, 512, %s72, [#allocation9], 128, 128, 8
    $region25: #{tpu_custom_call.1} parent=1 // pred_fallthru
      _
    // Predicated region
    $region26: #{tpu_custom_call.1} parent=1 // pred_check
      _
    $region27: #{tpu_custom_call.1} parent=1 // pred_check_branch
      %79 = sbr.rel (0) target = $region29
    $region28: #{tpu_custom_call.1} parent=1 // pred_region
      _
    $region29: #{tpu_custom_call.1} parent=1 // pred_fallthru
      _
    // Predicated region
    $region30: #{tpu_custom_call.1} parent=1 // pred_check
      _
    $region31: #{tpu_custom_call.1} parent=1 // pred_check_branch
      %81 = sbr.rel (0) target = $region33
    $region32: #{tpu_custom_call.1} parent=1 // pred_region
      %82 = dma.done [#allocation3], 256
    $region33: #{tpu_custom_call.1} parent=1 // pred_fallthru
      _
    // Predicated region
    $region34: #{tpu_custom_call.1} parent=1 // pred_check
      _
    $region35: #{tpu_custom_call.1} parent=1 // pred_check_branch
      %84 = sbr.rel (0) target = $region37
    $region36: #{tpu_custom_call.1} parent=1 // pred_region
      %85 = dma.done [#allocation6], 256
    $region37: #{tpu_custom_call.1} parent=1 // pred_fallthru
      _
    // Predicated region
    $region38: #{tpu_custom_call.1} parent=1 // pred_check
      _
    $region39: #{tpu_custom_call.1} parent=1 // pred_check_branch
      %87 = sbr.rel (0) target = $region41
    $region40: #{tpu_custom_call.1} parent=1 // pred_region
      %88 = dma.done [#allocation6], 512
    $region41: #{tpu_custom_call.1} parent=1 // pred_fallthru
      _
    // Predicated region
    $region42: #{tpu_custom_call.1} parent=1 // pred_check
      _
    $region43: #{tpu_custom_call.1} parent=1 // pred_check_branch
      %90 = sbr.rel (0) target = $region45
    $region44: #{tpu_custom_call.1} parent=1 // pred_region
      %91 = dma.done [#allocation9], 512
    $region45: #{tpu_custom_call.1} parent=1 // pred_fallthru
      _
    // Predicated region
    $region46: #{tpu_custom_call.1} parent=1 // pred_check
      _
    $region47: #{tpu_custom_call.1} parent=1 // pred_check_branch
      %93 = sbr.rel (0) target = $region49
    $region48: #{tpu_custom_call.1} parent=1 // pred_region
      %94 = dma.done [#allocation9], 512
    $region49: #{tpu_custom_call.1} parent=1 // pred_fallthru
      _
    %v95 = vld [vmem:[#allocation2] sm:$0xff]
    %v96 = vld [vmem:[#allocation2 + $0x8] sm:$0xff]
    %v97 = vld [vmem:[#allocation5] sm:$0xff]
    %v98 = vld [vmem:[#allocation5 + $0x8] sm:$0xff]
    %v99 = vld [vmem:[#allocation7] sm:$0xff]
    %v100 = vld [vmem:[#allocation7 + $0x8] sm:$0xff]
    %v101 = vld [vmem:[#allocation7 + $0x10] sm:$0xff]
    %v102 = vld [vmem:[#allocation7 + $0x18] sm:$0xff]
    %v103 = vld [vmem:[%s3] sm:$0x1]
    %v105 = vlaneseq
    %v106 = vshrl.u32 %v105, 7
    %v107 = vsub.s32 0, %v106
    %v108 = vrot.slane %v103, %v107
    %vm110 = vcmask 130048
    %v112 = vsel %vm110, %v95, 0
    %v115 = vsel %vm110, %v96, 0
    %117 = vmatprep.subr.mxu0 0.0
    %118 = vmatpush1.msra.mxu0 %v97
    %119 = vmatprep.subr.mxu0 0.0
    %120 = vmatpush1.msra.mxu0 %v98
    %121 = vmatprep.subr.mxu0 0.0
    %122 = vmatpush1.msra.mxu0 0.0
    %123 = vmatprep.subr.mxu0 0.0
    %124 = vmatpush1.msra.mxu0 0.0
    %125 = vmatprep.subr.mxu0 0.0
    %126 = vmatpush1.msra.mxu0 0.0
    %127 = vmatprep.subr.mxu0 0.0
    %128 = vmatpush1.msra.mxu0 0.0
    %129 = vmatprep.subr.mxu0 0.0
    %130 = vmatpush1.msra.mxu0 0.0
    %131 = vmatprep.subr.mxu0 0.0
    %132 = vmatpush1.msra.mxu0 0.0
    %133 = vmatprep.subr.mxu0 0.0
    %134 = vmatpush1.msra.mxu0 0.0
    %135 = vmatprep.subr.mxu0 0.0
    %136 = vmatpush1.msra.mxu0 0.0
    %137 = vmatprep.subr.mxu0 0.0
    %138 = vmatpush1.msra.mxu0 0.0
    %139 = vmatprep.subr.mxu0 0.0
    %140 = vmatpush1.msra.mxu0 0.0
    %141 = vmatprep.subr.mxu0 0.0
    %142 = vmatpush1.msra.mxu0 0.0
    %143 = vmatprep.subr.mxu0 0.0
    %144 = vmatpush1.msra.mxu0 0.0
    %145 = vmatprep.subr.mxu0 0.0
    %146 = vmatpush1.msra.mxu0 0.0
    %147 = vmatprep.subr.mxu0 0.0
    %148 = vmatpush1.msra.mxu0 0.0
    %149 = vmatprep.subr.mxu0 0.0
    %150 = vmatpush1.msra.mxu0 0.0
    %151 = vmatprep.subr.mxu0 0.0
    %152 = vmatpush1.msra.mxu0 0.0
    %153 = vmatprep.subr.mxu0 0.0
    %154 = vmatpush1.msra.mxu0 0.0
    %155 = vmatprep.subr.mxu0 0.0
    %156 = vmatpush1.msra.mxu0 0.0
    %157 = vmatprep.subr.mxu0 0.0
    %158 = vmatpush1.msra.mxu0 0.0
    %159 = vmatprep.subr.mxu0 0.0
    %160 = vmatpush1.msra.mxu0 0.0
    %161 = vmatprep.subr.mxu0 0.0
    %162 = vmatpush1.msra.mxu0 0.0
    %163 = vmatprep.subr.mxu0 0.0
    %164 = vmatpush1.msra.mxu0 0.0
    %165 = vmatprep.subr.mxu0 0.0
    %166 = vmatpush1.msra.mxu0 0.0
    %167 = vmatprep.subr.mxu0 0.0
    %168 = vmatpush1.msra.mxu0 0.0
    %169 = vmatprep.subr.mxu0 0.0
    %170 = vmatpush1.msra.mxu0 0.0
    %171 = vmatprep.subr.mxu0 0.0
    %172 = vmatpush1.msra.mxu0 0.0
    %173 = vmatprep.subr.mxu0 0.0
    %174 = vmatpush1.msra.mxu0 0.0
    %175 = vmatprep.subr.mxu0 0.0
    %176 = vmatpush1.msra.mxu0 0.0
    %177 = vmatprep.subr.mxu0 0.0
    %178 = vmatpush1.msra.mxu0 0.0
    %179 = vmatprep.subr.mxu0 0.0
    %180 = vmatpush1.msra.mxu0 0.0
    %181 = vmatprep.mubr.f32.mxu0 0.0
    %182 = vmatmul.mubr.f32.gmra.mrb[0].mxu0 %v112
    %v183 = vpop.f32.mrb[0].mxu0
    %v184 = vadd.f32 %v108, %v183
    %v185 = vpop.f32.mrb[0].mxu0
    %186 = vmatprep.mubr.f32.mxu0 0.0
    %187 = vmatmul.mubr.f32.gmra.mrb[0].mxu0 %v115
    %v188 = vpop.f32.mrb[0].mxu0
    %v189 = vadd.f32 %v108, %v188
    %v190 = vpop.f32.mrb[0].mxu0
    %191 = vdwg.mxu0
    %vm192 = vcmask 261120
    %v194 = vsel %vm192, 0.0, 0
    %196 = vmatprep.subr.mxu0 0.0
    %197 = vmatpush1.msra.mxu0 %v99
    %198 = vmatprep.subr.mxu0 0.0
    %199 = vmatpush1.msra.mxu0 %v100
    %200 = vmatprep.subr.mxu0 0.0
    %201 = vmatpush1.msra.mxu0 %v101
    %202 = vmatprep.subr.mxu0 0.0
    %203 = vmatpush1.msra.mxu0 %v102
    %204 = vmatprep.subr.mxu0 0.0
    %205 = vmatpush1.msra.mxu0 0.0
    %206 = vmatprep.subr.mxu0 0.0
    %207 = vmatpush1.msra.mxu0 0.0
    %208 = vmatprep.subr.mxu0 0.0
    %209 = vmatpush1.msra.mxu0 0.0
    %210 = vmatprep.subr.mxu0 0.0
    %211 = vmatpush1.msra.mxu0 0.0
    %212 = vmatprep.subr.mxu0 0.0
    %213 = vmatpush1.msra.mxu0 0.0
    %214 = vmatprep.subr.mxu0 0.0
    %215 = vmatpush1.msra.mxu0 0.0
    %216 = vmatprep.subr.mxu0 0.0
    %217 = vmatpush1.msra.mxu0 0.0
    %218 = vmatprep.subr.mxu0 0.0
    %219 = vmatpush1.msra.mxu0 0.0
    %220 = vmatprep.subr.mxu0 0.0
    %221 = vmatpush1.msra.mxu0 0.0
    %222 = vmatprep.subr.mxu0 0.0
    %223 = vmatpush1.msra.mxu0 0.0
    %224 = vmatprep.subr.mxu0 0.0
    %225 = vmatpush1.msra.mxu0 0.0
    %226 = vmatprep.subr.mxu0 0.0
    %227 = vmatpush1.msra.mxu0 0.0
    %228 = vmatprep.subr.mxu0 0.0
    %229 = vmatpush1.msra.mxu0 0.0
    %230 = vmatprep.subr.mxu0 0.0
    %231 = vmatpush1.msra.mxu0 0.0
    %232 = vmatprep.subr.mxu0 0.0
    %233 = vmatpush1.msra.mxu0 0.0
    %234 = vmatprep.subr.mxu0 0.0
    %235 = vmatpush1.msra.mxu0 0.0
    %236 = vmatprep.subr.mxu0 0.0
    %237 = vmatpush1.msra.mxu0 0.0
    %238 = vmatprep.subr.mxu0 0.0
    %239 = vmatpush1.msra.mxu0 0.0
    %240 = vmatprep.subr.mxu0 0.0
    %241 = vmatpush1.msra.mxu0 0.0
    %242 = vmatprep.subr.mxu0 0.0
    %243 = vmatpush1.msra.mxu0 0.0
    %244 = vmatprep.subr.mxu0 0.0
    %245 = vmatpush1.msra.mxu0 0.0
    %246 = vmatprep.subr.mxu0 0.0
    %247 = vmatpush1.msra.mxu0 0.0
    %248 = vmatprep.subr.mxu0 0.0
    %249 = vmatpush1.msra.mxu0 0.0
    %250 = vmatprep.subr.mxu0 0.0
    %251 = vmatpush1.msra.mxu0 0.0
    %252 = vmatprep.subr.mxu0 0.0
    %253 = vmatpush1.msra.mxu0 0.0
    %254 = vmatprep.subr.mxu0 0.0
    %255 = vmatpush1.msra.mxu0 0.0
    %256 = vmatprep.subr.mxu0 0.0
    %257 = vmatpush1.msra.mxu0 0.0
    %258 = vmatprep.subr.mxu0 0.0
    %259 = vmatpush1.msra.mxu0 0.0
    %260 = vmatprep.mubr.f32.mxu0 0.0
    %261 = vmatmul.mubr.f32.gmra.mrb[0].mxu0 %v194
    %v262 = vpop.f32.mrb[0].mxu0
    %v263 = vadd.f32 0.0, %v262
    %v264 = vpop.f32.mrb[0].mxu0
    %265 = vdwg.mxu0
    %v266 = vadd.f32 %v184, %v263
    %v267 = vxor.u32 %v266, 2147483648
    %v268 = vmul.f32 %v267, 1.442695
    %v269 = vpow.pop %v268
    %v270 = vadd.f32 %v269, 1.0
    %v271 = vrcp.pop %v270
    %v272 = vmul.f32 1.0, %v271
    %v273 = vtanh.pop %v266
    %v274 = vmul.f32 %v272, 0.0
    %276 = vrot.lane.b32.xlu0 %v273, 64
    %v277 = vpop.permute.xlu0 %276
    %v279 = vmul.f32 %v272, %v277
    %281 = vrot.lane.b32.xlu0 %v279, 32
    %v282 = vpop.permute.xlu0 %281
    %v284 = vadd.f32 %v274, %v282
    %v285 = vtanh.pop %v284
    %287 = vrot.lane.b32.xlu0 %v285, 64
    %v288 = vpop.permute.xlu0 %287
    %v290 = vmul.f32 %v272, %v288
    %292 = vrot.lane.b32.xlu0 %v290, 32
    %v293 = vpop.permute.xlu0 %292
    %v294 = vsel %vm192, %v293, 0
    %296 = vmatprep.subr.mxu0 0.0
    %297 = vmatpush1.msra.mxu0 %v99
    %298 = vmatprep.subr.mxu0 0.0
    %299 = vmatpush1.msra.mxu0 %v100
    %300 = vmatprep.subr.mxu0 0.0
    %301 = vmatpush1.msra.mxu0 %v101
    %302 = vmatprep.subr.mxu0 0.0
    %303 = vmatpush1.msra.mxu0 %v102
    %304 = vmatprep.subr.mxu0 0.0
    %305 = vmatpush1.msra.mxu0 0.0
    %306 = vmatprep.subr.mxu0 0.0
    %307 = vmatpush1.msra.mxu0 0.0
    %308 = vmatprep.subr.mxu0 0.0
    %309 = vmatpush1.msra.mxu0 0.0
    %310 = vmatprep.subr.mxu0 0.0
    %311 = vmatpush1.msra.mxu0 0.0
    %312 = vmatprep.subr.mxu0 0.0
    %313 = vmatpush1.msra.mxu0 0.0
    %314 = vmatprep.subr.mxu0 0.0
    %315 = vmatpush1.msra.mxu0 0.0
    %316 = vmatprep.subr.mxu0 0.0
    %317 = vmatpush1.msra.mxu0 0.0
    %318 = vmatprep.subr.mxu0 0.0
    %319 = vmatpush1.msra.mxu0 0.0
    %320 = vmatprep.subr.mxu0 0.0
    %321 = vmatpush1.msra.mxu0 0.0
    %322 = vmatprep.subr.mxu0 0.0
    %323 = vmatpush1.msra.mxu0 0.0
    %324 = vmatprep.subr.mxu0 0.0
    %325 = vmatpush1.msra.mxu0 0.0
    %326 = vmatprep.subr.mxu0 0.0
    %327 = vmatpush1.msra.mxu0 0.0
    %328 = vmatprep.subr.mxu0 0.0
    %329 = vmatpush1.msra.mxu0 0.0
    %330 = vmatprep.subr.mxu0 0.0
    %331 = vmatpush1.msra.mxu0 0.0
    %332 = vmatprep.subr.mxu0 0.0
    %333 = vmatpush1.msra.mxu0 0.0
    %334 = vmatprep.subr.mxu0 0.0
    %335 = vmatpush1.msra.mxu0 0.0
    %336 = vmatprep.subr.mxu0 0.0
    %337 = vmatpush1.msra.mxu0 0.0
    %338 = vmatprep.subr.mxu0 0.0
    %339 = vmatpush1.msra.mxu0 0.0
    %340 = vmatprep.subr.mxu0 0.0
    %341 = vmatpush1.msra.mxu0 0.0
    %342 = vmatprep.subr.mxu0 0.0
    %343 = vmatpush1.msra.mxu0 0.0
    %344 = vmatprep.subr.mxu0 0.0
    %345 = vmatpush1.msra.mxu0 0.0
    %346 = vmatprep.subr.mxu0 0.0
    %347 = vmatpush1.msra.mxu0 0.0
    %348 = vmatprep.subr.mxu0 0.0
    %349 = vmatpush1.msra.mxu0 0.0
    %350 = vmatprep.subr.mxu0 0.0
    %351 = vmatpush1.msra.mxu0 0.0
    %352 = vmatprep.subr.mxu0 0.0
    %353 = vmatpush1.msra.mxu0 0.0
    %354 = vmatprep.subr.mxu0 0.0
    %355 = vmatpush1.msra.mxu0 0.0
    %356 = vmatprep.subr.mxu0 0.0
    %357 = vmatpush1.msra.mxu0 0.0
    %358 = vmatprep.subr.mxu0 0.0
    %359 = vmatpush1.msra.mxu0 0.0
    %360 = vmatprep.mubr.f32.mxu0 0.0
    %361 = vmatmul.mubr.f32.gmra.mrb[0].mxu0 %v294
    %v362 = vpop.f32.mrb[0].mxu0
    %v363 = vadd.f32 0.0, %v362
    %v364 = vpop.f32.mrb[0].mxu0
    %365 = vdwg.mxu0
    %v367 = vrot.slane %v363, 6
    %v369 = vadd.f32 %v184, %v367
    %v370 = vxor.u32 %v369, 2147483648
    %v371 = vmul.f32 %v370, 1.442695
    %v372 = vpow.pop %v371
    %v373 = vadd.f32 %v372, 1.0
    %v374 = vrcp.pop %v373
    %v375 = vmul.f32 1.0, %v374
    %v376 = vtanh.pop %v369
    %v378 = vrot.slane %v284, 6
    %v380 = vmul.f32 %v375, %v378
    %382 = vrot.lane.b32.xlu0 %v376, 64
    %v383 = vpop.permute.xlu0 %382
    %v385 = vmul.f32 %v375, %v383
    %387 = vrot.lane.b32.xlu0 %v385, 32
    %v388 = vpop.permute.xlu0 %387
    %v390 = vadd.f32 %v380, %v388
    %v391 = vtanh.pop %v390
    %393 = vrot.lane.b32.xlu0 %v391, 64
    %v394 = vpop.permute.xlu0 %393
    %v396 = vmul.f32 %v375, %v394
    %v398 = vrot.slane %v396, 2
    %399 = vrot.lane.b32.xlu0 %v398, 32
    %v400 = vpop.permute.xlu0 %399
    %v401 = vsel %vm192, %v400, 0
    %403 = vmatprep.subr.mxu0 0.0
    %404 = vmatpush1.msra.mxu0 %v99
    %405 = vmatprep.subr.mxu0 0.0
    %406 = vmatpush1.msra.mxu0 %v100
    %407 = vmatprep.subr.mxu0 0.0
    %408 = vmatpush1.msra.mxu0 %v101
    %409 = vmatprep.subr.mxu0 0.0
    %410 = vmatpush1.msra.mxu0 %v102
    %411 = vmatprep.subr.mxu0 0.0
    %412 = vmatpush1.msra.mxu0 0.0
    %413 = vmatprep.subr.mxu0 0.0
    %414 = vmatpush1.msra.mxu0 0.0
    %415 = vmatprep.subr.mxu0 0.0
    %416 = vmatpush1.msra.mxu0 0.0
    %417 = vmatprep.subr.mxu0 0.0
    %418 = vmatpush1.msra.mxu0 0.0
    %419 = vmatprep.subr.mxu0 0.0
    %420 = vmatpush1.msra.mxu0 0.0
    %421 = vmatprep.subr.mxu0 0.0
    %422 = vmatpush1.msra.mxu0 0.0
    %423 = vmatprep.subr.mxu0 0.0
    %424 = vmatpush1.msra.mxu0 0.0
    %425 = vmatprep.subr.mxu0 0.0
    %426 = vmatpush1.msra.mxu0 0.0
    %427 = vmatprep.subr.mxu0 0.0
    %428 = vmatpush1.msra.mxu0 0.0
    %429 = vmatprep.subr.mxu0 0.0
    %430 = vmatpush1.msra.mxu0 0.0
    %431 = vmatprep.subr.mxu0 0.0
    %432 = vmatpush1.msra.mxu0 0.0
    %433 = vmatprep.subr.mxu0 0.0
    %434 = vmatpush1.msra.mxu0 0.0
    %435 = vmatprep.subr.mxu0 0.0
    %436 = vmatpush1.msra.mxu0 0.0
    %437 = vmatprep.subr.mxu0 0.0
    %438 = vmatpush1.msra.mxu0 0.0
    %439 = vmatprep.subr.mxu0 0.0
    %440 = vmatpush1.msra.mxu0 0.0
    %441 = vmatprep.subr.mxu0 0.0
    %442 = vmatpush1.msra.mxu0 0.0
    %443 = vmatprep.subr.mxu0 0.0
    %444 = vmatpush1.msra.mxu0 0.0
    %445 = vmatprep.subr.mxu0 0.0
    %446 = vmatpush1.msra.mxu0 0.0
    %447 = vmatprep.subr.mxu0 0.0
    %448 = vmatpush1.msra.mxu0 0.0
    %449 = vmatprep.subr.mxu0 0.0
    %450 = vmatpush1.msra.mxu0 0.0
    %451 = vmatprep.subr.mxu0 0.0
    %452 = vmatpush1.msra.mxu0 0.0
    %453 = vmatprep.subr.mxu0 0.0
    %454 = vmatpush1.msra.mxu0 0.0
    %455 = vmatprep.subr.mxu0 0.0
    %456 = vmatpush1.msra.mxu0 0.0
    %457 = vmatprep.subr.mxu0 0.0
    %458 = vmatpush1.msra.mxu0 0.0
    %459 = vmatprep.subr.mxu0 0.0
    %460 = vmatpush1.msra.mxu0 0.0
    %461 = vmatprep.subr.mxu0 0.0
    %462 = vmatpush1.msra.mxu0 0.0
    %463 = vmatprep.subr.mxu0 0.0
    %464 = vmatpush1.msra.mxu0 0.0
    %465 = vmatprep.subr.mxu0 0.0
    %466 = vmatpush1.msra.mxu0 0.0
    %467 = vmatprep.mubr.f32.mxu0 0.0
    %468 = vmatmul.mubr.f32.gmra.mrb[0].mxu0 %v401
    %v469 = vpop.f32.mrb[0].mxu0
    %v470 = vadd.f32 0.0, %v469
    %v471 = vpop.f32.mrb[0].mxu0
    %472 = vdwg.mxu0
    %v474 = vrot.slane %v470, 4
    %v476 = vadd.f32 %v184, %v474
    %v477 = vxor.u32 %v476, 2147483648
    %v478 = vmul.f32 %v477, 1.442695
    %v479 = vpow.pop %v478
    %v480 = vadd.f32 %v479, 1.0
    %v481 = vrcp.pop %v480
    %v482 = vmul.f32 1.0, %v481
    %v483 = vtanh.pop %v476
    %v485 = vrot.slane %v390, 6
    %v487 = vmul.f32 %v482, %v485
    %489 = vrot.lane.b32.xlu0 %v483, 64
    %v490 = vpop.permute.xlu0 %489
    %v492 = vmul.f32 %v482, %v490
    %494 = vrot.lane.b32.xlu0 %v492, 32
    %v495 = vpop.permute.xlu0 %494
    %v497 = vadd.f32 %v487, %v495
    %v498 = vtanh.pop %v497
    %500 = vrot.lane.b32.xlu0 %v498, 64
    %v501 = vpop.permute.xlu0 %500
    %v503 = vmul.f32 %v482, %v501
    %v505 = vrot.slane %v503, 4
    %506 = vrot.lane.b32.xlu0 %v505, 32
    %v507 = vpop.permute.xlu0 %506
    %v508 = vsel %vm192, %v507, 0
    %510 = vmatprep.subr.mxu0 0.0
    %511 = vmatpush1.msra.mxu0 %v99
    %512 = vmatprep.subr.mxu0 0.0
    %513 = vmatpush1.msra.mxu0 %v100
    %514 = vmatprep.subr.mxu0 0.0
    %515 = vmatpush1.msra.mxu0 %v101
    %516 = vmatprep.subr.mxu0 0.0
    %517 = vmatpush1.msra.mxu0 %v102
    %518 = vmatprep.subr.mxu0 0.0
    %519 = vmatpush1.msra.mxu0 0.0
    %520 = vmatprep.subr.mxu0 0.0
    %521 = vmatpush1.msra.mxu0 0.0
    %522 = vmatprep.subr.mxu0 0.0
    %523 = vmatpush1.msra.mxu0 0.0
    %524 = vmatprep.subr.mxu0 0.0
    %525 = vmatpush1.msra.mxu0 0.0
    %526 = vmatprep.subr.mxu0 0.0
    %527 = vmatpush1.msra.mxu0 0.0
    %528 = vmatprep.subr.mxu0 0.0
    %529 = vmatpush1.msra.mxu0 0.0
    %530 = vmatprep.subr.mxu0 0.0
    %531 = vmatpush1.msra.mxu0 0.0
    %532 = vmatprep.subr.mxu0 0.0
    %533 = vmatpush1.msra.mxu0 0.0
    %534 = vmatprep.subr.mxu0 0.0
    %535 = vmatpush1.msra.mxu0 0.0
    %536 = vmatprep.subr.mxu0 0.0
    %537 = vmatpush1.msra.mxu0 0.0
    %538 = vmatprep.subr.mxu0 0.0
    %539 = vmatpush1.msra.mxu0 0.0
    %540 = vmatprep.subr.mxu0 0.0
    %541 = vmatpush1.msra.mxu0 0.0
    %542 = vmatprep.subr.mxu0 0.0
    %543 = vmatpush1.msra.mxu0 0.0
    %544 = vmatprep.subr.mxu0 0.0
    %545 = vmatpush1.msra.mxu0 0.0
    %546 = vmatprep.subr.mxu0 0.0
    %547 = vmatpush1.msra.mxu0 0.0
    %548 = vmatprep.subr.mxu0 0.0
    %549 = vmatpush1.msra.mxu0 0.0
    %550 = vmatprep.subr.mxu0 0.0
    %551 = vmatpush1.msra.mxu0 0.0
    %552 = vmatprep.subr.mxu0 0.0
    %553 = vmatpush1.msra.mxu0 0.0
    %554 = vmatprep.subr.mxu0 0.0
    %555 = vmatpush1.msra.mxu0 0.0
    %556 = vmatprep.subr.mxu0 0.0
    %557 = vmatpush1.msra.mxu0 0.0
    %558 = vmatprep.subr.mxu0 0.0
    %559 = vmatpush1.msra.mxu0 0.0
    %560 = vmatprep.subr.mxu0 0.0
    %561 = vmatpush1.msra.mxu0 0.0
    %562 = vmatprep.subr.mxu0 0.0
    %563 = vmatpush1.msra.mxu0 0.0
    %564 = vmatprep.subr.mxu0 0.0
    %565 = vmatpush1.msra.mxu0 0.0
    %566 = vmatprep.subr.mxu0 0.0
    %567 = vmatpush1.msra.mxu0 0.0
    %568 = vmatprep.subr.mxu0 0.0
    %569 = vmatpush1.msra.mxu0 0.0
    %570 = vmatprep.subr.mxu0 0.0
    %571 = vmatpush1.msra.mxu0 0.0
    %572 = vmatprep.subr.mxu0 0.0
    %573 = vmatpush1.msra.mxu0 0.0
    %574 = vmatprep.mubr.f32.mxu0 0.0
    %575 = vmatmul.mubr.f32.gmra.mrb[0].mxu0 %v508
    %v576 = vpop.f32.mrb[0].mxu0
    %v577 = vadd.f32 0.0, %v576
    %v578 = vpop.f32.mrb[0].mxu0
    %579 = vdwg.mxu0
    %v581 = vrot.slane %v577, 2
    %v583 = vadd.f32 %v184, %v581
    %v584 = vxor.u32 %v583, 2147483648
    %v585 = vmul.f32 %v584, 1.442695
    %v586 = vpow.pop %v585
    %v587 = vadd.f32 %v586, 1.0
    %v588 = vrcp.pop %v587
    %v589 = vmul.f32 1.0, %v588
    %v590 = vtanh.pop %v583
    %v592 = vrot.slane %v497, 6
    %v594 = vmul.f32 %v589, %v592
    %596 = vrot.lane.b32.xlu0 %v590, 64
    %v597 = vpop.permute.xlu0 %596
    %v599 = vmul.f32 %v589, %v597
    %601 = vrot.lane.b32.xlu0 %v599, 32
    %v602 = vpop.permute.xlu0 %601
    %v604 = vadd.f32 %v594, %v602
    %v605 = vtanh.pop %v604
    %607 = vrot.lane.b32.xlu0 %v605, 64
    %v608 = vpop.permute.xlu0 %607
    %v610 = vmul.f32 %v589, %v608
    %v612 = vrot.slane %v610, 6
    %613 = vrot.lane.b32.xlu0 %v612, 32
    %v614 = vpop.permute.xlu0 %613
    %v615 = vsel %vm192, %v614, 0
    %617 = vmatprep.subr.mxu0 0.0
    %618 = vmatpush1.msra.mxu0 %v99
    %619 = vmatprep.subr.mxu0 0.0
    %620 = vmatpush1.msra.mxu0 %v100
    %621 = vmatprep.subr.mxu0 0.0
    %622 = vmatpush1.msra.mxu0 %v101
    %623 = vmatprep.subr.mxu0 0.0
    %624 = vmatpush1.msra.mxu0 %v102
    %625 = vmatprep.subr.mxu0 0.0
    %626 = vmatpush1.msra.mxu0 0.0
    %627 = vmatprep.subr.mxu0 0.0
    %628 = vmatpush1.msra.mxu0 0.0
    %629 = vmatprep.subr.mxu0 0.0
    %630 = vmatpush1.msra.mxu0 0.0
    %631 = vmatprep.subr.mxu0 0.0
    %632 = vmatpush1.msra.mxu0 0.0
    %633 = vmatprep.subr.mxu0 0.0
    %634 = vmatpush1.msra.mxu0 0.0
    %635 = vmatprep.subr.mxu0 0.0
    %636 = vmatpush1.msra.mxu0 0.0
    %637 = vmatprep.subr.mxu0 0.0
    %638 = vmatpush1.msra.mxu0 0.0
    %639 = vmatprep.subr.mxu0 0.0
    %640 = vmatpush1.msra.mxu0 0.0
    %641 = vmatprep.subr.mxu0 0.0
    %642 = vmatpush1.msra.mxu0 0.0
    %643 = vmatprep.subr.mxu0 0.0
    %644 = vmatpush1.msra.mxu0 0.0
    %645 = vmatprep.subr.mxu0 0.0
    %646 = vmatpush1.msra.mxu0 0.0
    %647 = vmatprep.subr.mxu0 0.0
    %648 = vmatpush1.msra.mxu0 0.0
    %649 = vmatprep.subr.mxu0 0.0
    %650 = vmatpush1.msra.mxu0 0.0
    %651 = vmatprep.subr.mxu0 0.0
    %652 = vmatpush1.msra.mxu0 0.0
    %653 = vmatprep.subr.mxu0 0.0
    %654 = vmatpush1.msra.mxu0 0.0
    %655 = vmatprep.subr.mxu0 0.0
    %656 = vmatpush1.msra.mxu0 0.0
    %657 = vmatprep.subr.mxu0 0.0
    %658 = vmatpush1.msra.mxu0 0.0
    %659 = vmatprep.subr.mxu0 0.0
    %660 = vmatpush1.msra.mxu0 0.0
    %661 = vmatprep.subr.mxu0 0.0
    %662 = vmatpush1.msra.mxu0 0.0
    %663 = vmatprep.subr.mxu0 0.0
    %664 = vmatpush1.msra.mxu0 0.0
    %665 = vmatprep.subr.mxu0 0.0
    %666 = vmatpush1.msra.mxu0 0.0
    %667 = vmatprep.subr.mxu0 0.0
    %668 = vmatpush1.msra.mxu0 0.0
    %669 = vmatprep.subr.mxu0 0.0
    %670 = vmatpush1.msra.mxu0 0.0
    %671 = vmatprep.subr.mxu0 0.0
    %672 = vmatpush1.msra.mxu0 0.0
    %673 = vmatprep.subr.mxu0 0.0
    %674 = vmatpush1.msra.mxu0 0.0
    %675 = vmatprep.subr.mxu0 0.0
    %676 = vmatpush1.msra.mxu0 0.0
    %677 = vmatprep.subr.mxu0 0.0
    %678 = vmatpush1.msra.mxu0 0.0
    %679 = vmatprep.subr.mxu0 0.0
    %680 = vmatpush1.msra.mxu0 0.0
    %681 = vmatprep.mubr.f32.mxu0 0.0
    %682 = vmatmul.mubr.f32.gmra.mrb[0].mxu0 %v615
    %v683 = vpop.f32.mrb[0].mxu0
    %v684 = vadd.f32 0.0, %v683
    %v685 = vpop.f32.mrb[0].mxu0
    %686 = vdwg.mxu0
    %v687 = vadd.f32 %v189, %v684
    %v688 = vxor.u32 %v687, 2147483648
    %v689 = vmul.f32 %v688, 1.442695
    %v690 = vpow.pop %v689
    %v691 = vadd.f32 %v690, 1.0
    %v692 = vrcp.pop %v691
    %v693 = vmul.f32 1.0, %v692
    %v694 = vtanh.pop %v687
    %v696 = vrot.slane %v604, 6
    %v698 = vmul.f32 %v693, %v696
    %700 = vrot.lane.b32.xlu0 %v694, 64
    %v701 = vpop.permute.xlu0 %700
    %v703 = vmul.f32 %v693, %v701
    %705 = vrot.lane.b32.xlu0 %v703, 32
    %v706 = vpop.permute.xlu0 %705
    %v708 = vadd.f32 %v698, %v706
    %v709 = vtanh.pop %v708
    %711 = vrot.lane.b32.xlu0 %v709, 64
    %v712 = vpop.permute.xlu0 %711
    %v714 = vmul.f32 %v693, %v712
    %716 = vrot.lane.b32.xlu0 %v714, 32
    %v717 = vpop.permute.xlu0 %716
    %v718 = vsel %vm192, %v717, 0
    %720 = vmatprep.subr.mxu0 0.0
    %721 = vmatpush1.msra.mxu0 %v99
    %722 = vmatprep.subr.mxu0 0.0
    %723 = vmatpush1.msra.mxu0 %v100
    %724 = vmatprep.subr.mxu0 0.0
    %725 = vmatpush1.msra.mxu0 %v101
    %726 = vmatprep.subr.mxu0 0.0
    %727 = vmatpush1.msra.mxu0 %v102
    %728 = vmatprep.subr.mxu0 0.0
    %729 = vmatpush1.msra.mxu0 0.0
    %730 = vmatprep.subr.mxu0 0.0
    %731 = vmatpush1.msra.mxu0 0.0
    %732 = vmatprep.subr.mxu0 0.0
    %733 = vmatpush1.msra.mxu0 0.0
    %734 = vmatprep.subr.mxu0 0.0
    %735 = vmatpush1.msra.mxu0 0.0
    %736 = vmatprep.subr.mxu0 0.0
    %737 = vmatpush1.msra.mxu0 0.0
    %738 = vmatprep.subr.mxu0 0.0
    %739 = vmatpush1.msra.mxu0 0.0
    %740 = vmatprep.subr.mxu0 0.0
    %741 = vmatpush1.msra.mxu0 0.0
    %742 = vmatprep.subr.mxu0 0.0
    %743 = vmatpush1.msra.mxu0 0.0
    %744 = vmatprep.subr.mxu0 0.0
    %745 = vmatpush1.msra.mxu0 0.0
    %746 = vmatprep.subr.mxu0 0.0
    %747 = vmatpush1.msra.mxu0 0.0
    %748 = vmatprep.subr.mxu0 0.0
    %749 = vmatpush1.msra.mxu0 0.0
    %750 = vmatprep.subr.mxu0 0.0
    %751 = vmatpush1.msra.mxu0 0.0
    %752 = vmatprep.subr.mxu0 0.0
    %753 = vmatpush1.msra.mxu0 0.0
    %754 = vmatprep.subr.mxu0 0.0
    %755 = vmatpush1.msra.mxu0 0.0
    %756 = vmatprep.subr.mxu0 0.0
    %757 = vmatpush1.msra.mxu0 0.0
    %758 = vmatprep.subr.mxu0 0.0
    %759 = vmatpush1.msra.mxu0 0.0
    %760 = vmatprep.subr.mxu0 0.0
    %761 = vmatpush1.msra.mxu0 0.0
    %762 = vmatprep.subr.mxu0 0.0
    %763 = vmatpush1.msra.mxu0 0.0
    %764 = vmatprep.subr.mxu0 0.0
    %765 = vmatpush1.msra.mxu0 0.0
    %766 = vmatprep.subr.mxu0 0.0
    %767 = vmatpush1.msra.mxu0 0.0
    %768 = vmatprep.subr.mxu0 0.0
    %769 = vmatpush1.msra.mxu0 0.0
    %770 = vmatprep.subr.mxu0 0.0
    %771 = vmatpush1.msra.mxu0 0.0
    %772 = vmatprep.subr.mxu0 0.0
    %773 = vmatpush1.msra.mxu0 0.0
    %774 = vmatprep.subr.mxu0 0.0
    %775 = vmatpush1.msra.mxu0 0.0
    %776 = vmatprep.subr.mxu0 0.0
    %777 = vmatpush1.msra.mxu0 0.0
    %778 = vmatprep.subr.mxu0 0.0
    %779 = vmatpush1.msra.mxu0 0.0
    %780 = vmatprep.subr.mxu0 0.0
    %781 = vmatpush1.msra.mxu0 0.0
    %782 = vmatprep.subr.mxu0 0.0
    %783 = vmatpush1.msra.mxu0 0.0
    %784 = vmatprep.mubr.f32.mxu0 0.0
    %785 = vmatmul.mubr.f32.gmra.mrb[0].mxu0 %v718
    %v786 = vpop.f32.mrb[0].mxu0
    %v787 = vadd.f32 0.0, %v786
    %v788 = vpop.f32.mrb[0].mxu0
    %789 = vdwg.mxu0
    %v791 = vrot.slane %v787, 6
    %v793 = vadd.f32 %v189, %v791
    %v794 = vxor.u32 %v793, 2147483648
    %v795 = vmul.f32 %v794, 1.442695
    %v796 = vpow.pop %v795
    %v797 = vadd.f32 %v796, 1.0
    %v798 = vrcp.pop %v797
    %v799 = vmul.f32 1.0, %v798
    %v800 = vtanh.pop %v793
    %v802 = vrot.slane %v708, 6
    %v804 = vmul.f32 %v799, %v802
    %806 = vrot.lane.b32.xlu0 %v800, 64
    %v807 = vpop.permute.xlu0 %806
    %v809 = vmul.f32 %v799, %v807
    %811 = vrot.lane.b32.xlu0 %v809, 32
    %v812 = vpop.permute.xlu0 %811
    %v814 = vadd.f32 %v804, %v812
    %v815 = vtanh.pop %v814
    %817 = vrot.lane.b32.xlu0 %v815, 64
    %v818 = vpop.permute.xlu0 %817
    %v820 = vmul.f32 %v799, %v818
    %v822 = vrot.slane %v820, 2
    %823 = vrot.lane.b32.xlu0 %v822, 32
    %v824 = vpop.permute.xlu0 %823
    %v825 = vsel %vm192, %v824, 0
    %827 = vmatprep.subr.mxu0 0.0
    %828 = vmatpush1.msra.mxu0 %v99
    %829 = vmatprep.subr.mxu0 0.0
    %830 = vmatpush1.msra.mxu0 %v100
    %831 = vmatprep.subr.mxu0 0.0
    %832 = vmatpush1.msra.mxu0 %v101
    %833 = vmatprep.subr.mxu0 0.0
    %834 = vmatpush1.msra.mxu0 %v102
    %835 = vmatprep.subr.mxu0 0.0
    %836 = vmatpush1.msra.mxu0 0.0
    %837 = vmatprep.subr.mxu0 0.0
    %838 = vmatpush1.msra.mxu0 0.0
    %839 = vmatprep.subr.mxu0 0.0
    %840 = vmatpush1.msra.mxu0 0.0
    %841 = vmatprep.subr.mxu0 0.0
    %842 = vmatpush1.msra.mxu0 0.0
    %843 = vmatprep.subr.mxu0 0.0
    %844 = vmatpush1.msra.mxu0 0.0
    %845 = vmatprep.subr.mxu0 0.0
    %846 = vmatpush1.msra.mxu0 0.0
    %847 = vmatprep.subr.mxu0 0.0
    %848 = vmatpush1.msra.mxu0 0.0
    %849 = vmatprep.subr.mxu0 0.0
    %850 = vmatpush1.msra.mxu0 0.0
    %851 = vmatprep.subr.mxu0 0.0
    %852 = vmatpush1.msra.mxu0 0.0
    %853 = vmatprep.subr.mxu0 0.0
    %854 = vmatpush1.msra.mxu0 0.0
    %855 = vmatprep.subr.mxu0 0.0
    %856 = vmatpush1.msra.mxu0 0.0
    %857 = vmatprep.subr.mxu0 0.0
    %858 = vmatpush1.msra.mxu0 0.0
    %859 = vmatprep.subr.mxu0 0.0
    %860 = vmatpush1.msra.mxu0 0.0
    %861 = vmatprep.subr.mxu0 0.0
    %862 = vmatpush1.msra.mxu0 0.0
    %863 = vmatprep.subr.mxu0 0.0
    %864 = vmatpush1.msra.mxu0 0.0
    %865 = vmatprep.subr.mxu0 0.0
    %866 = vmatpush1.msra.mxu0 0.0
    %867 = vmatprep.subr.mxu0 0.0
    %868 = vmatpush1.msra.mxu0 0.0
    %869 = vmatprep.subr.mxu0 0.0
    %870 = vmatpush1.msra.mxu0 0.0
    %871 = vmatprep.subr.mxu0 0.0
    %872 = vmatpush1.msra.mxu0 0.0
    %873 = vmatprep.subr.mxu0 0.0
    %874 = vmatpush1.msra.mxu0 0.0
    %875 = vmatprep.subr.mxu0 0.0
    %876 = vmatpush1.msra.mxu0 0.0
    %877 = vmatprep.subr.mxu0 0.0
    %878 = vmatpush1.msra.mxu0 0.0
    %879 = vmatprep.subr.mxu0 0.0
    %880 = vmatpush1.msra.mxu0 0.0
    %881 = vmatprep.subr.mxu0 0.0
    %882 = vmatpush1.msra.mxu0 0.0
    %883 = vmatprep.subr.mxu0 0.0
    %884 = vmatpush1.msra.mxu0 0.0
    %885 = vmatprep.subr.mxu0 0.0
    %886 = vmatpush1.msra.mxu0 0.0
    %887 = vmatprep.subr.mxu0 0.0
    %888 = vmatpush1.msra.mxu0 0.0
    %889 = vmatprep.subr.mxu0 0.0
    %890 = vmatpush1.msra.mxu0 0.0
    %891 = vmatprep.mubr.f32.mxu0 0.0
    %892 = vmatmul.mubr.f32.gmra.mrb[0].mxu0 %v825
    %v893 = vpop.f32.mrb[0].mxu0
    %v894 = vadd.f32 0.0, %v893
    %v895 = vpop.f32.mrb[0].mxu0
    %896 = vdwg.mxu0
    %v898 = vrot.slane %v894, 4
    %v900 = vadd.f32 %v189, %v898
    %v901 = vxor.u32 %v900, 2147483648
    %v902 = vmul.f32 %v901, 1.442695
    %v903 = vpow.pop %v902
    %v904 = vadd.f32 %v903, 1.0
    %v905 = vrcp.pop %v904
    %v906 = vmul.f32 1.0, %v905
    %v907 = vtanh.pop %v900
    %v909 = vrot.slane %v814, 6
    %v911 = vmul.f32 %v906, %v909
    %913 = vrot.lane.b32.xlu0 %v907, 64
    %v914 = vpop.permute.xlu0 %913
    %v916 = vmul.f32 %v906, %v914
    %918 = vrot.lane.b32.xlu0 %v916, 32
    %v919 = vpop.permute.xlu0 %918
    %v921 = vadd.f32 %v911, %v919
    %v922 = vtanh.pop %v921
    %924 = vrot.lane.b32.xlu0 %v922, 64
    %v925 = vpop.permute.xlu0 %924
    %v927 = vmul.f32 %v906, %v925
    %v929 = vrot.slane %v927, 4
    %930 = vrot.lane.b32.xlu0 %v929, 32
    %v931 = vpop.permute.xlu0 %930
    %v932 = vsel %vm192, %v931, 0
    %934 = vmatprep.subr.mxu0 0.0
    %935 = vmatpush1.msra.mxu0 %v99
    %936 = vmatprep.subr.mxu0 0.0
    %937 = vmatpush1.msra.mxu0 %v100
    %938 = vmatprep.subr.mxu0 0.0
    %939 = vmatpush1.msra.mxu0 %v101
    %940 = vmatprep.subr.mxu0 0.0
    %941 = vmatpush1.msra.mxu0 %v102
    %942 = vmatprep.subr.mxu0 0.0
    %943 = vmatpush1.msra.mxu0 0.0
    %944 = vmatprep.subr.mxu0 0.0
    %945 = vmatpush1.msra.mxu0 0.0
    %946 = vmatprep.subr.mxu0 0.0
    %947 = vmatpush1.msra.mxu0 0.0
    %948 = vmatprep.subr.mxu0 0.0
    %949 = vmatpush1.msra.mxu0 0.0
    %950 = vmatprep.subr.mxu0 0.0
    %951 = vmatpush1.msra.mxu0 0.0
    %952 = vmatprep.subr.mxu0 0.0
    %953 = vmatpush1.msra.mxu0 0.0
    %954 = vmatprep.subr.mxu0 0.0
    %955 = vmatpush1.msra.mxu0 0.0
    %956 = vmatprep.subr.mxu0 0.0
    %957 = vmatpush1.msra.mxu0 0.0
    %958 = vmatprep.subr.mxu0 0.0
    %959 = vmatpush1.msra.mxu0 0.0
    %960 = vmatprep.subr.mxu0 0.0
    %961 = vmatpush1.msra.mxu0 0.0
    %962 = vmatprep.subr.mxu0 0.0
    %963 = vmatpush1.msra.mxu0 0.0
    %964 = vmatprep.subr.mxu0 0.0
    %965 = vmatpush1.msra.mxu0 0.0
    %966 = vmatprep.subr.mxu0 0.0
    %967 = vmatpush1.msra.mxu0 0.0
    %968 = vmatprep.subr.mxu0 0.0
    %969 = vmatpush1.msra.mxu0 0.0
    %970 = vmatprep.subr.mxu0 0.0
    %971 = vmatpush1.msra.mxu0 0.0
    %972 = vmatprep.subr.mxu0 0.0
    %973 = vmatpush1.msra.mxu0 0.0
    %974 = vmatprep.subr.mxu0 0.0
    %975 = vmatpush1.msra.mxu0 0.0
    %976 = vmatprep.subr.mxu0 0.0
    %977 = vmatpush1.msra.mxu0 0.0
    %978 = vmatprep.subr.mxu0 0.0
    %979 = vmatpush1.msra.mxu0 0.0
    %980 = vmatprep.subr.mxu0 0.0
    %981 = vmatpush1.msra.mxu0 0.0
    %982 = vmatprep.subr.mxu0 0.0
    %983 = vmatpush1.msra.mxu0 0.0
    %984 = vmatprep.subr.mxu0 0.0
    %985 = vmatpush1.msra.mxu0 0.0
    %986 = vmatprep.subr.mxu0 0.0
    %987 = vmatpush1.msra.mxu0 0.0
    %988 = vmatprep.subr.mxu0 0.0
    %989 = vmatpush1.msra.mxu0 0.0
    %990 = vmatprep.subr.mxu0 0.0
    %991 = vmatpush1.msra.mxu0 0.0
    %992 = vmatprep.subr.mxu0 0.0
    %993 = vmatpush1.msra.mxu0 0.0
    %994 = vmatprep.subr.mxu0 0.0
    %995 = vmatpush1.msra.mxu0 0.0
    %996 = vmatprep.subr.mxu0 0.0
    %997 = vmatpush1.msra.mxu0 0.0
    %998 = vmatprep.mubr.f32.mxu0 0.0
    %999 = vmatmul.mubr.f32.gmra.mrb[0].mxu0 %v932
    %v1000 = vpop.f32.mrb[0].mxu0
    %v1001 = vadd.f32 0.0, %v1000
    %v1002 = vpop.f32.mrb[0].mxu0
    %1003 = vdwg.mxu0
    %v1005 = vrot.slane %v1001, 2
    %v1007 = vadd.f32 %v189, %v1005
    %v1008 = vxor.u32 %v1007, 2147483648
    %v1009 = vmul.f32 %v1008, 1.442695
    %v1010 = vpow.pop %v1009
    %v1011 = vadd.f32 %v1010, 1.0
    %v1012 = vrcp.pop %v1011
    %v1013 = vmul.f32 1.0, %v1012
    %v1014 = vtanh.pop %v1007
    %v1016 = vrot.slane %v921, 6
    %v1018 = vmul.f32 %v1013, %v1016
    %1020 = vrot.lane.b32.xlu0 %v1014, 64
    %v1021 = vpop.permute.xlu0 %1020
    %v1023 = vmul.f32 %v1013, %v1021
    %1025 = vrot.lane.b32.xlu0 %v1023, 32
    %v1026 = vpop.permute.xlu0 %1025
    %v1028 = vadd.f32 %v1018, %v1026
    %v1029 = vtanh.pop %v1028
    %1031 = vrot.lane.b32.xlu0 %v1029, 64
    %v1032 = vpop.permute.xlu0 %1031
    %v1034 = vmul.f32 %v1013, %v1032
    %vm1035 = vcmask 1041408
    %v1036 = vsel %vm1035, %v290, %v396
    %vm1037 = vcmask 1043456
    %v1038 = vsel %vm1037, %v1036, %v503
    %vm1039 = vcmask 1045504
    %v1040 = vsel %vm1039, %v1038, %v610
    %v1041 = vsel %vm1035, %v714, %v820
    %v1042 = vsel %vm1037, %v1041, %v927
    %v1043 = vsel %vm1039, %v1042, %v1034
    %v1044 = vld [vmem:[#allocation8] sm:$0xff]
    %v1045 = vld [vmem:[#allocation8 + $0x8] sm:$0xff]
    %v1046 = vld [vmem:[#allocation8 + $0x10] sm:$0xff]
    %v1047 = vld [vmem:[#allocation8 + $0x18] sm:$0xff]
    %v1048 = vld [vmem:[#allocation10] sm:$0xff]
    %v1049 = vld [vmem:[#allocation10 + $0x8] sm:$0xff]
    %v1050 = vld [vmem:[#allocation10 + $0x10] sm:$0xff]
    %v1051 = vld [vmem:[#allocation10 + $0x18] sm:$0xff]
    %v1052 = vld [vmem:[%s6] sm:$0x1]
    %v1054 = vlaneseq
    %v1055 = vshrl.u32 %v1054, 7
    %v1056 = vsub.s32 0, %v1055
    %v1057 = vrot.slane %v1052, %v1056
    %1061 = vrot.lane.b32.xlu0 %v1040, 32
    %v1062 = vpop.permute.xlu0 %1061
    %1063 = vrot.lane.b32.xlu0 %v1043, 32
    %v1064 = vpop.permute.xlu0 %1063
    %v1065 = vsel %vm192, %v1062, 0
    %v1067 = vsel %vm192, %v1064, 0
    %1069 = vmatprep.subr.mxu0 0.0
    %1070 = vmatpush1.msra.mxu0 %v1044
    %1071 = vmatprep.subr.mxu0 0.0
    %1072 = vmatpush1.msra.mxu0 %v1045
    %1073 = vmatprep.subr.mxu0 0.0
    %1074 = vmatpush1.msra.mxu0 %v1046
    %1075 = vmatprep.subr.mxu0 0.0
    %1076 = vmatpush1.msra.mxu0 %v1047
    %1077 = vmatprep.subr.mxu0 0.0
    %1078 = vmatpush1.msra.mxu0 0.0
    %1079 = vmatprep.subr.mxu0 0.0
    %1080 = vmatpush1.msra.mxu0 0.0
    %1081 = vmatprep.subr.mxu0 0.0
    %1082 = vmatpush1.msra.mxu0 0.0
    %1083 = vmatprep.subr.mxu0 0.0
    %1084 = vmatpush1.msra.mxu0 0.0
    %1085 = vmatprep.subr.mxu0 0.0
    %1086 = vmatpush1.msra.mxu0 0.0
    %1087 = vmatprep.subr.mxu0 0.0
    %1088 = vmatpush1.msra.mxu0 0.0
    %1089 = vmatprep.subr.mxu0 0.0
    %1090 = vmatpush1.msra.mxu0 0.0
    %1091 = vmatprep.subr.mxu0 0.0
    %1092 = vmatpush1.msra.mxu0 0.0
    %1093 = vmatprep.subr.mxu0 0.0
    %1094 = vmatpush1.msra.mxu0 0.0
    %1095 = vmatprep.subr.mxu0 0.0
    %1096 = vmatpush1.msra.mxu0 0.0
    %1097 = vmatprep.subr.mxu0 0.0
    %1098 = vmatpush1.msra.mxu0 0.0
    %1099 = vmatprep.subr.mxu0 0.0
    %1100 = vmatpush1.msra.mxu0 0.0
    %1101 = vmatprep.subr.mxu0 0.0
    %1102 = vmatpush1.msra.mxu0 0.0
    %1103 = vmatprep.subr.mxu0 0.0
    %1104 = vmatpush1.msra.mxu0 0.0
    %1105 = vmatprep.subr.mxu0 0.0
    %1106 = vmatpush1.msra.mxu0 0.0
    %1107 = vmatprep.subr.mxu0 0.0
    %1108 = vmatpush1.msra.mxu0 0.0
    %1109 = vmatprep.subr.mxu0 0.0
    %1110 = vmatpush1.msra.mxu0 0.0
    %1111 = vmatprep.subr.mxu0 0.0
    %1112 = vmatpush1.msra.mxu0 0.0
    %1113 = vmatprep.subr.mxu0 0.0
    %1114 = vmatpush1.msra.mxu0 0.0
    %1115 = vmatprep.subr.mxu0 0.0
    %1116 = vmatpush1.msra.mxu0 0.0
    %1117 = vmatprep.subr.mxu0 0.0
    %1118 = vmatpush1.msra.mxu0 0.0
    %1119 = vmatprep.subr.mxu0 0.0
    %1120 = vmatpush1.msra.mxu0 0.0
    %1121 = vmatprep.subr.mxu0 0.0
    %1122 = vmatpush1.msra.mxu0 0.0
    %1123 = vmatprep.subr.mxu0 0.0
    %1124 = vmatpush1.msra.mxu0 0.0
    %1125 = vmatprep.subr.mxu0 0.0
    %1126 = vmatpush1.msra.mxu0 0.0
    %1127 = vmatprep.subr.mxu0 0.0
    %1128 = vmatpush1.msra.mxu0 0.0
    %1129 = vmatprep.subr.mxu0 0.0
    %1130 = vmatpush1.msra.mxu0 0.0
    %1131 = vmatprep.subr.mxu0 0.0
    %1132 = vmatpush1.msra.mxu0 0.0
    %1133 = vmatprep.mubr.f32.mxu0 0.0
    %1134 = vmatmul.mubr.f32.gmra.mrb[0].mxu0 %v1065
    %v1135 = vpop.f32.mrb[0].mxu0
    %v1136 = vadd.f32 %v1057, %v1135
    %v1137 = vpop.f32.mrb[0].mxu0
    %1138 = vmatprep.mubr.f32.mxu0 0.0
    %1139 = vmatmul.mubr.f32.gmra.mrb[0].mxu0 %v1067
    %v1140 = vpop.f32.mrb[0].mxu0
    %v1141 = vadd.f32 %v1057, %v1140
    %v1142 = vpop.f32.mrb[0].mxu0
    %1143 = vdwg.mxu0
    %1144 = vmatprep.subr.mxu0 0.0
    %1145 = vmatpush1.msra.mxu0 %v1048
    %1146 = vmatprep.subr.mxu0 0.0
    %1147 = vmatpush1.msra.mxu0 %v1049
    %1148 = vmatprep.subr.mxu0 0.0
    %1149 = vmatpush1.msra.mxu0 %v1050
    %1150 = vmatprep.subr.mxu0 0.0
    %1151 = vmatpush1.msra.mxu0 %v1051
    %1152 = vmatprep.subr.mxu0 0.0
    %1153 = vmatpush1.msra.mxu0 0.0
    %1154 = vmatprep.subr.mxu0 0.0
    %1155 = vmatpush1.msra.mxu0 0.0
    %1156 = vmatprep.subr.mxu0 0.0
    %1157 = vmatpush1.msra.mxu0 0.0
    %1158 = vmatprep.subr.mxu0 0.0
    %1159 = vmatpush1.msra.mxu0 0.0
    %1160 = vmatprep.subr.mxu0 0.0
    %1161 = vmatpush1.msra.mxu0 0.0
    %1162 = vmatprep.subr.mxu0 0.0
    %1163 = vmatpush1.msra.mxu0 0.0
    %1164 = vmatprep.subr.mxu0 0.0
    %1165 = vmatpush1.msra.mxu0 0.0
    %1166 = vmatprep.subr.mxu0 0.0
    %1167 = vmatpush1.msra.mxu0 0.0
    %1168 = vmatprep.subr.mxu0 0.0
    %1169 = vmatpush1.msra.mxu0 0.0
    %1170 = vmatprep.subr.mxu0 0.0
    %1171 = vmatpush1.msra.mxu0 0.0
    %1172 = vmatprep.subr.mxu0 0.0
    %1173 = vmatpush1.msra.mxu0 0.0
    %1174 = vmatprep.subr.mxu0 0.0
    %1175 = vmatpush1.msra.mxu0 0.0
    %1176 = vmatprep.subr.mxu0 0.0
    %1177 = vmatpush1.msra.mxu0 0.0
    %1178 = vmatprep.subr.mxu0 0.0
    %1179 = vmatpush1.msra.mxu0 0.0
    %1180 = vmatprep.subr.mxu0 0.0
    %1181 = vmatpush1.msra.mxu0 0.0
    %1182 = vmatprep.subr.mxu0 0.0
    %1183 = vmatpush1.msra.mxu0 0.0
    %1184 = vmatprep.subr.mxu0 0.0
    %1185 = vmatpush1.msra.mxu0 0.0
    %1186 = vmatprep.subr.mxu0 0.0
    %1187 = vmatpush1.msra.mxu0 0.0
    %1188 = vmatprep.subr.mxu0 0.0
    %1189 = vmatpush1.msra.mxu0 0.0
    %1190 = vmatprep.subr.mxu0 0.0
    %1191 = vmatpush1.msra.mxu0 0.0
    %1192 = vmatprep.subr.mxu0 0.0
    %1193 = vmatpush1.msra.mxu0 0.0
    %1194 = vmatprep.subr.mxu0 0.0
    %1195 = vmatpush1.msra.mxu0 0.0
    %1196 = vmatprep.subr.mxu0 0.0
    %1197 = vmatpush1.msra.mxu0 0.0
    %1198 = vmatprep.subr.mxu0 0.0
    %1199 = vmatpush1.msra.mxu0 0.0
    %1200 = vmatprep.subr.mxu0 0.0
    %1201 = vmatpush1.msra.mxu0 0.0
    %1202 = vmatprep.subr.mxu0 0.0
    %1203 = vmatpush1.msra.mxu0 0.0
    %1204 = vmatprep.subr.mxu0 0.0
    %1205 = vmatpush1.msra.mxu0 0.0
    %1206 = vmatprep.subr.mxu0 0.0
    %1207 = vmatpush1.msra.mxu0 0.0
    %1208 = vmatprep.mubr.f32.mxu0 0.0
    %1209 = vmatmul.mubr.f32.gmra.mrb[0].mxu0 %v194
    %v1210 = vpop.f32.mrb[0].mxu0
    %v1211 = vadd.f32 0.0, %v1210
    %v1212 = vpop.f32.mrb[0].mxu0
    %1213 = vdwg.mxu0
    %v1214 = vadd.f32 %v1136, %v1211
    %v1215 = vxor.u32 %v1214, 2147483648
    %v1216 = vmul.f32 %v1215, 1.442695
    %v1217 = vpow.pop %v1216
    %v1218 = vadd.f32 %v1217, 1.0
    %v1219 = vrcp.pop %v1218
    %v1220 = vmul.f32 1.0, %v1219
    %v1221 = vtanh.pop %v1214
    %v1222 = vmul.f32 %v1220, 0.0
    %1224 = vrot.lane.b32.xlu0 %v1221, 64
    %v1225 = vpop.permute.xlu0 %1224
    %v1227 = vmul.f32 %v1220, %v1225
    %1229 = vrot.lane.b32.xlu0 %v1227, 32
    %v1230 = vpop.permute.xlu0 %1229
    %v1232 = vadd.f32 %v1222, %v1230
    %v1233 = vtanh.pop %v1232
    %1235 = vrot.lane.b32.xlu0 %v1233, 64
    %v1236 = vpop.permute.xlu0 %1235
    %v1238 = vmul.f32 %v1220, %v1236
    %1240 = vrot.lane.b32.xlu0 %v1238, 32
    %v1241 = vpop.permute.xlu0 %1240
    %v1242 = vsel %vm192, %v1241, 0
    %1244 = vmatprep.subr.mxu0 0.0
    %1245 = vmatpush1.msra.mxu0 %v1048
    %1246 = vmatprep.subr.mxu0 0.0
    %1247 = vmatpush1.msra.mxu0 %v1049
    %1248 = vmatprep.subr.mxu0 0.0
    %1249 = vmatpush1.msra.mxu0 %v1050
    %1250 = vmatprep.subr.mxu0 0.0
    %1251 = vmatpush1.msra.mxu0 %v1051
    %1252 = vmatprep.subr.mxu0 0.0
    %1253 = vmatpush1.msra.mxu0 0.0
    %1254 = vmatprep.subr.mxu0 0.0
    %1255 = vmatpush1.msra.mxu0 0.0
    %1256 = vmatprep.subr.mxu0 0.0
    %1257 = vmatpush1.msra.mxu0 0.0
    %1258 = vmatprep.subr.mxu0 0.0
    %1259 = vmatpush1.msra.mxu0 0.0
    %1260 = vmatprep.subr.mxu0 0.0
    %1261 = vmatpush1.msra.mxu0 0.0
    %1262 = vmatprep.subr.mxu0 0.0
    %1263 = vmatpush1.msra.mxu0 0.0
    %1264 = vmatprep.subr.mxu0 0.0
    %1265 = vmatpush1.msra.mxu0 0.0
    %1266 = vmatprep.subr.mxu0 0.0
    %1267 = vmatpush1.msra.mxu0 0.0
    %1268 = vmatprep.subr.mxu0 0.0
    %1269 = vmatpush1.msra.mxu0 0.0
    %1270 = vmatprep.subr.mxu0 0.0
    %1271 = vmatpush1.msra.mxu0 0.0
    %1272 = vmatprep.subr.mxu0 0.0
    %1273 = vmatpush1.msra.mxu0 0.0
    %1274 = vmatprep.subr.mxu0 0.0
    %1275 = vmatpush1.msra.mxu0 0.0
    %1276 = vmatprep.subr.mxu0 0.0
    %1277 = vmatpush1.msra.mxu0 0.0
    %1278 = vmatprep.subr.mxu0 0.0
    %1279 = vmatpush1.msra.mxu0 0.0
    %1280 = vmatprep.subr.mxu0 0.0
    %1281 = vmatpush1.msra.mxu0 0.0
    %1282 = vmatprep.subr.mxu0 0.0
    %1283 = vmatpush1.msra.mxu0 0.0
    %1284 = vmatprep.subr.mxu0 0.0
    %1285 = vmatpush1.msra.mxu0 0.0
    %1286 = vmatprep.subr.mxu0 0.0
    %1287 = vmatpush1.msra.mxu0 0.0
    %1288 = vmatprep.subr.mxu0 0.0
    %1289 = vmatpush1.msra.mxu0 0.0
    %1290 = vmatprep.subr.mxu0 0.0
    %1291 = vmatpush1.msra.mxu0 0.0
    %1292 = vmatprep.subr.mxu0 0.0
    %1293 = vmatpush1.msra.mxu0 0.0
    %1294 = vmatprep.subr.mxu0 0.0
    %1295 = vmatpush1.msra.mxu0 0.0
    %1296 = vmatprep.subr.mxu0 0.0
    %1297 = vmatpush1.msra.mxu0 0.0
    %1298 = vmatprep.subr.mxu0 0.0
    %1299 = vmatpush1.msra.mxu0 0.0
    %1300 = vmatprep.subr.mxu0 0.0
    %1301 = vmatpush1.msra.mxu0 0.0
    %1302 = vmatprep.subr.mxu0 0.0
    %1303 = vmatpush1.msra.mxu0 0.0
    %1304 = vmatprep.subr.mxu0 0.0
    %1305 = vmatpush1.msra.mxu0 0.0
    %1306 = vmatprep.subr.mxu0 0.0
    %1307 = vmatpush1.msra.mxu0 0.0
    %1308 = vmatprep.mubr.f32.mxu0 0.0
    %1309 = vmatmul.mubr.f32.gmra.mrb[0].mxu0 %v1242
    %v1310 = vpop.f32.mrb[0].mxu0
    %v1311 = vadd.f32 0.0, %v1310
    %v1312 = vpop.f32.mrb[0].mxu0
    %1313 = vdwg.mxu0
    %v1315 = vrot.slane %v1311, 6
    %v1317 = vadd.f32 %v1136, %v1315
    %v1318 = vxor.u32 %v1317, 2147483648
    %v1319 = vmul.f32 %v1318, 1.442695
    %v1320 = vpow.pop %v1319
    %v1321 = vadd.f32 %v1320, 1.0
    %v1322 = vrcp.pop %v1321
    %v1323 = vmul.f32 1.0, %v1322
    %v1324 = vtanh.pop %v1317
    %v1326 = vrot.slane %v1232, 6
    %v1328 = vmul.f32 %v1323, %v1326
    %1330 = vrot.lane.b32.xlu0 %v1324, 64
    %v1331 = vpop.permute.xlu0 %1330
    %v1333 = vmul.f32 %v1323, %v1331
    %1335 = vrot.lane.b32.xlu0 %v1333, 32
    %v1336 = vpop.permute.xlu0 %1335
    %v1338 = vadd.f32 %v1328, %v1336
    %v1339 = vtanh.pop %v1338
    %1341 = vrot.lane.b32.xlu0 %v1339, 64
    %v1342 = vpop.permute.xlu0 %1341
    %v1344 = vmul.f32 %v1323, %v1342
    %v1346 = vrot.slane %v1344, 2
    %1347 = vrot.lane.b32.xlu0 %v1346, 32
    %v1348 = vpop.permute.xlu0 %1347
    %v1349 = vsel %vm192, %v1348, 0
    %1351 = vmatprep.subr.mxu0 0.0
    %1352 = vmatpush1.msra.mxu0 %v1048
    %1353 = vmatprep.subr.mxu0 0.0
    %1354 = vmatpush1.msra.mxu0 %v1049
    %1355 = vmatprep.subr.mxu0 0.0
    %1356 = vmatpush1.msra.mxu0 %v1050
    %1357 = vmatprep.subr.mxu0 0.0
    %1358 = vmatpush1.msra.mxu0 %v1051
    %1359 = vmatprep.subr.mxu0 0.0
    %1360 = vmatpush1.msra.mxu0 0.0
    %1361 = vmatprep.subr.mxu0 0.0
    %1362 = vmatpush1.msra.mxu0 0.0
    %1363 = vmatprep.subr.mxu0 0.0
    %1364 = vmatpush1.msra.mxu0 0.0
    %1365 = vmatprep.subr.mxu0 0.0
    %1366 = vmatpush1.msra.mxu0 0.0
    %1367 = vmatprep.subr.mxu0 0.0
    %1368 = vmatpush1.msra.mxu0 0.0
    %1369 = vmatprep.subr.mxu0 0.0
    %1370 = vmatpush1.msra.mxu0 0.0
    %1371 = vmatprep.subr.mxu0 0.0
    %1372 = vmatpush1.msra.mxu0 0.0
    %1373 = vmatprep.subr.mxu0 0.0
    %1374 = vmatpush1.msra.mxu0 0.0
    %1375 = vmatprep.subr.mxu0 0.0
    %1376 = vmatpush1.msra.mxu0 0.0
    %1377 = vmatprep.subr.mxu0 0.0
    %1378 = vmatpush1.msra.mxu0 0.0
    %1379 = vmatprep.subr.mxu0 0.0
    %1380 = vmatpush1.msra.mxu0 0.0
    %1381 = vmatprep.subr.mxu0 0.0
    %1382 = vmatpush1.msra.mxu0 0.0
    %1383 = vmatprep.subr.mxu0 0.0
    %1384 = vmatpush1.msra.mxu0 0.0
    %1385 = vmatprep.subr.mxu0 0.0
    %1386 = vmatpush1.msra.mxu0 0.0
    %1387 = vmatprep.subr.mxu0 0.0
    %1388 = vmatpush1.msra.mxu0 0.0
    %1389 = vmatprep.subr.mxu0 0.0
    %1390 = vmatpush1.msra.mxu0 0.0
    %1391 = vmatprep.subr.mxu0 0.0
    %1392 = vmatpush1.msra.mxu0 0.0
    %1393 = vmatprep.subr.mxu0 0.0
    %1394 = vmatpush1.msra.mxu0 0.0
    %1395 = vmatprep.subr.mxu0 0.0
    %1396 = vmatpush1.msra.mxu0 0.0
    %1397 = vmatprep.subr.mxu0 0.0
    %1398 = vmatpush1.msra.mxu0 0.0
    %1399 = vmatprep.subr.mxu0 0.0
    %1400 = vmatpush1.msra.mxu0 0.0
    %1401 = vmatprep.subr.mxu0 0.0
    %1402 = vmatpush1.msra.mxu0 0.0
    %1403 = vmatprep.subr.mxu0 0.0
    %1404 = vmatpush1.msra.mxu0 0.0
    %1405 = vmatprep.subr.mxu0 0.0
    %1406 = vmatpush1.msra.mxu0 0.0
    %1407 = vmatprep.subr.mxu0 0.0
    %1408 = vmatpush1.msra.mxu0 0.0
    %1409 = vmatprep.subr.mxu0 0.0
    %1410 = vmatpush1.msra.mxu0 0.0
    %1411 = vmatprep.subr.mxu0 0.0
    %1412 = vmatpush1.msra.mxu0 0.0
    %1413 = vmatprep.subr.mxu0 0.0
    %1414 = vmatpush1.msra.mxu0 0.0
    %1415 = vmatprep.mubr.f32.mxu0 0.0
    %1416 = vmatmul.mubr.f32.gmra.mrb[0].mxu0 %v1349
    %v1417 = vpop.f32.mrb[0].mxu0
    %v1418 = vadd.f32 0.0, %v1417
    %v1419 = vpop.f32.mrb[0].mxu0
    %1420 = vdwg.mxu0
    %v1422 = vrot.slane %v1418, 4
    %v1424 = vadd.f32 %v1136, %v1422
    %v1425 = vxor.u32 %v1424, 2147483648
    %v1426 = vmul.f32 %v1425, 1.442695
    %v1427 = vpow.pop %v1426
    %v1428 = vadd.f32 %v1427, 1.0
    %v1429 = vrcp.pop %v1428
    %v1430 = vmul.f32 1.0, %v1429
    %v1431 = vtanh.pop %v1424
    %v1433 = vrot.slane %v1338, 6
    %v1435 = vmul.f32 %v1430, %v1433
    %1437 = vrot.lane.b32.xlu0 %v1431, 64
    %v1438 = vpop.permute.xlu0 %1437
    %v1440 = vmul.f32 %v1430, %v1438
    %1442 = vrot.lane.b32.xlu0 %v1440, 32
    %v1443 = vpop.permute.xlu0 %1442
    %v1445 = vadd.f32 %v1435, %v1443
    %v1446 = vtanh.pop %v1445
    %1448 = vrot.lane.b32.xlu0 %v1446, 64
    %v1449 = vpop.permute.xlu0 %1448
    %v1451 = vmul.f32 %v1430, %v1449
    %v1453 = vrot.slane %v1451, 4
    %1454 = vrot.lane.b32.xlu0 %v1453, 32
    %v1455 = vpop.permute.xlu0 %1454
    %v1456 = vsel %vm192, %v1455, 0
    %1458 = vmatprep.subr.mxu0 0.0
    %1459 = vmatpush1.msra.mxu0 %v1048
    %1460 = vmatprep.subr.mxu0 0.0
    %1461 = vmatpush1.msra.mxu0 %v1049
    %1462 = vmatprep.subr.mxu0 0.0
    %1463 = vmatpush1.msra.mxu0 %v1050
    %1464 = vmatprep.subr.mxu0 0.0
    %1465 = vmatpush1.msra.mxu0 %v1051
    %1466 = vmatprep.subr.mxu0 0.0
    %1467 = vmatpush1.msra.mxu0 0.0
    %1468 = vmatprep.subr.mxu0 0.0
    %1469 = vmatpush1.msra.mxu0 0.0
    %1470 = vmatprep.subr.mxu0 0.0
    %1471 = vmatpush1.msra.mxu0 0.0
    %1472 = vmatprep.subr.mxu0 0.0
    %1473 = vmatpush1.msra.mxu0 0.0
    %1474 = vmatprep.subr.mxu0 0.0
    %1475 = vmatpush1.msra.mxu0 0.0
    %1476 = vmatprep.subr.mxu0 0.0
    %1477 = vmatpush1.msra.mxu0 0.0
    %1478 = vmatprep.subr.mxu0 0.0
    %1479 = vmatpush1.msra.mxu0 0.0
    %1480 = vmatprep.subr.mxu0 0.0
    %1481 = vmatpush1.msra.mxu0 0.0
    %1482 = vmatprep.subr.mxu0 0.0
    %1483 = vmatpush1.msra.mxu0 0.0
    %1484 = vmatprep.subr.mxu0 0.0
    %1485 = vmatpush1.msra.mxu0 0.0
    %1486 = vmatprep.subr.mxu0 0.0
    %1487 = vmatpush1.msra.mxu0 0.0
    %1488 = vmatprep.subr.mxu0 0.0
    %1489 = vmatpush1.msra.mxu0 0.0
    %1490 = vmatprep.subr.mxu0 0.0
    %1491 = vmatpush1.msra.mxu0 0.0
    %1492 = vmatprep.subr.mxu0 0.0
    %1493 = vmatpush1.msra.mxu0 0.0
    %1494 = vmatprep.subr.mxu0 0.0
    %1495 = vmatpush1.msra.mxu0 0.0
    %1496 = vmatprep.subr.mxu0 0.0
    %1497 = vmatpush1.msra.mxu0 0.0
    %1498 = vmatprep.subr.mxu0 0.0
    %1499 = vmatpush1.msra.mxu0 0.0
    %1500 = vmatprep.subr.mxu0 0.0
    %1501 = vmatpush1.msra.mxu0 0.0
    %1502 = vmatprep.subr.mxu0 0.0
    %1503 = vmatpush1.msra.mxu0 0.0
    %1504 = vmatprep.subr.mxu0 0.0
    %1505 = vmatpush1.msra.mxu0 0.0
    %1506 = vmatprep.subr.mxu0 0.0
    %1507 = vmatpush1.msra.mxu0 0.0
    %1508 = vmatprep.subr.mxu0 0.0
    %1509 = vmatpush1.msra.mxu0 0.0
    %1510 = vmatprep.subr.mxu0 0.0
    %1511 = vmatpush1.msra.mxu0 0.0
    %1512 = vmatprep.subr.mxu0 0.0
    %1513 = vmatpush1.msra.mxu0 0.0
    %1514 = vmatprep.subr.mxu0 0.0
    %1515 = vmatpush1.msra.mxu0 0.0
    %1516 = vmatprep.subr.mxu0 0.0
    %1517 = vmatpush1.msra.mxu0 0.0
    %1518 = vmatprep.subr.mxu0 0.0
    %1519 = vmatpush1.msra.mxu0 0.0
    %1520 = vmatprep.subr.mxu0 0.0
    %1521 = vmatpush1.msra.mxu0 0.0
    %1522 = vmatprep.mubr.f32.mxu0 0.0
    %1523 = vmatmul.mubr.f32.gmra.mrb[0].mxu0 %v1456
    %v1524 = vpop.f32.mrb[0].mxu0
    %v1525 = vadd.f32 0.0, %v1524
    %v1526 = vpop.f32.mrb[0].mxu0
    %1527 = vdwg.mxu0
    %v1529 = vrot.slane %v1525, 2
    %v1531 = vadd.f32 %v1136, %v1529
    %v1532 = vxor.u32 %v1531, 2147483648
    %v1533 = vmul.f32 %v1532, 1.442695
    %v1534 = vpow.pop %v1533
    %v1535 = vadd.f32 %v1534, 1.0
    %v1536 = vrcp.pop %v1535
    %v1537 = vmul.f32 1.0, %v1536
    %v1538 = vtanh.pop %v1531
    %v1540 = vrot.slane %v1445, 6
    %v1542 = vmul.f32 %v1537, %v1540
    %1544 = vrot.lane.b32.xlu0 %v1538, 64
    %v1545 = vpop.permute.xlu0 %1544
    %v1547 = vmul.f32 %v1537, %v1545
    %1549 = vrot.lane.b32.xlu0 %v1547, 32
    %v1550 = vpop.permute.xlu0 %1549
    %v1552 = vadd.f32 %v1542, %v1550
    %v1553 = vtanh.pop %v1552
    %1555 = vrot.lane.b32.xlu0 %v1553, 64
    %v1556 = vpop.permute.xlu0 %1555
    %v1558 = vmul.f32 %v1537, %v1556
    %v1560 = vrot.slane %v1558, 6
    %1561 = vrot.lane.b32.xlu0 %v1560, 32
    %v1562 = vpop.permute.xlu0 %1561
    %v1563 = vsel %vm192, %v1562, 0
    %1565 = vmatprep.subr.mxu0 0.0
    %1566 = vmatpush1.msra.mxu0 %v1048
    %1567 = vmatprep.subr.mxu0 0.0
    %1568 = vmatpush1.msra.mxu0 %v1049
    %1569 = vmatprep.subr.mxu0 0.0
    %1570 = vmatpush1.msra.mxu0 %v1050
    %1571 = vmatprep.subr.mxu0 0.0
    %1572 = vmatpush1.msra.mxu0 %v1051
    %1573 = vmatprep.subr.mxu0 0.0
    %1574 = vmatpush1.msra.mxu0 0.0
    %1575 = vmatprep.subr.mxu0 0.0
    %1576 = vmatpush1.msra.mxu0 0.0
    %1577 = vmatprep.subr.mxu0 0.0
    %1578 = vmatpush1.msra.mxu0 0.0
    %1579 = vmatprep.subr.mxu0 0.0
    %1580 = vmatpush1.msra.mxu0 0.0
    %1581 = vmatprep.subr.mxu0 0.0
    %1582 = vmatpush1.msra.mxu0 0.0
    %1583 = vmatprep.subr.mxu0 0.0
    %1584 = vmatpush1.msra.mxu0 0.0
    %1585 = vmatprep.subr.mxu0 0.0
    %1586 = vmatpush1.msra.mxu0 0.0
    %1587 = vmatprep.subr.mxu0 0.0
    %1588 = vmatpush1.msra.mxu0 0.0
    %1589 = vmatprep.subr.mxu0 0.0
    %1590 = vmatpush1.msra.mxu0 0.0
    %1591 = vmatprep.subr.mxu0 0.0
    %1592 = vmatpush1.msra.mxu0 0.0
    %1593 = vmatprep.subr.mxu0 0.0
    %1594 = vmatpush1.msra.mxu0 0.0
    %1595 = vmatprep.subr.mxu0 0.0
    %1596 = vmatpush1.msra.mxu0 0.0
    %1597 = vmatprep.subr.mxu0 0.0
    %1598 = vmatpush1.msra.mxu0 0.0
    %1599 = vmatprep.subr.mxu0 0.0
    %1600 = vmatpush1.msra.mxu0 0.0
    %1601 = vmatprep.subr.mxu0 0.0
    %1602 = vmatpush1.msra.mxu0 0.0
    %1603 = vmatprep.subr.mxu0 0.0
    %1604 = vmatpush1.msra.mxu0 0.0
    %1605 = vmatprep.subr.mxu0 0.0
    %1606 = vmatpush1.msra.mxu0 0.0
    %1607 = vmatprep.subr.mxu0 0.0
    %1608 = vmatpush1.msra.mxu0 0.0
    %1609 = vmatprep.subr.mxu0 0.0
    %1610 = vmatpush1.msra.mxu0 0.0
    %1611 = vmatprep.subr.mxu0 0.0
    %1612 = vmatpush1.msra.mxu0 0.0
    %1613 = vmatprep.subr.mxu0 0.0
    %1614 = vmatpush1.msra.mxu0 0.0
    %1615 = vmatprep.subr.mxu0 0.0
    %1616 = vmatpush1.msra.mxu0 0.0
    %1617 = vmatprep.subr.mxu0 0.0
    %1618 = vmatpush1.msra.mxu0 0.0
    %1619 = vmatprep.subr.mxu0 0.0
    %1620 = vmatpush1.msra.mxu0 0.0
    %1621 = vmatprep.subr.mxu0 0.0
    %1622 = vmatpush1.msra.mxu0 0.0
    %1623 = vmatprep.subr.mxu0 0.0
    %1624 = vmatpush1.msra.mxu0 0.0
    %1625 = vmatprep.subr.mxu0 0.0
    %1626 = vmatpush1.msra.mxu0 0.0
    %1627 = vmatprep.subr.mxu0 0.0
    %1628 = vmatpush1.msra.mxu0 0.0
    %1629 = vmatprep.mubr.f32.mxu0 0.0
    %1630 = vmatmul.mubr.f32.gmra.mrb[0].mxu0 %v1563
    %v1631 = vpop.f32.mrb[0].mxu0
    %v1632 = vadd.f32 0.0, %v1631
    %v1633 = vpop.f32.mrb[0].mxu0
    %1634 = vdwg.mxu0
    %v1635 = vadd.f32 %v1141, %v1632
    %v1636 = vxor.u32 %v1635, 2147483648
    %v1637 = vmul.f32 %v1636, 1.442695
    %v1638 = vpow.pop %v1637
    %v1639 = vadd.f32 %v1638, 1.0
    %v1640 = vrcp.pop %v1639
    %v1641 = vmul.f32 1.0, %v1640
    %v1642 = vtanh.pop %v1635
    %v1644 = vrot.slane %v1552, 6
    %v1646 = vmul.f32 %v1641, %v1644
    %1648 = vrot.lane.b32.xlu0 %v1642, 64
    %v1649 = vpop.permute.xlu0 %1648
    %v1651 = vmul.f32 %v1641, %v1649
    %1653 = vrot.lane.b32.xlu0 %v1651, 32
    %v1654 = vpop.permute.xlu0 %1653
    %v1656 = vadd.f32 %v1646, %v1654
    %v1657 = vtanh.pop %v1656
    %1659 = vrot.lane.b32.xlu0 %v1657, 64
    %v1660 = vpop.permute.xlu0 %1659
    %v1662 = vmul.f32 %v1641, %v1660
    %1664 = vrot.lane.b32.xlu0 %v1662, 32
    %v1665 = vpop.permute.xlu0 %1664
    %v1666 = vsel %vm192, %v1665, 0
    %1668 = vmatprep.subr.mxu0 0.0
    %1669 = vmatpush1.msra.mxu0 %v1048
    %1670 = vmatprep.subr.mxu0 0.0
    %1671 = vmatpush1.msra.mxu0 %v1049
    %1672 = vmatprep.subr.mxu0 0.0
    %1673 = vmatpush1.msra.mxu0 %v1050
    %1674 = vmatprep.subr.mxu0 0.0
    %1675 = vmatpush1.msra.mxu0 %v1051
    %1676 = vmatprep.subr.mxu0 0.0
    %1677 = vmatpush1.msra.mxu0 0.0
    %1678 = vmatprep.subr.mxu0 0.0
    %1679 = vmatpush1.msra.mxu0 0.0
    %1680 = vmatprep.subr.mxu0 0.0
    %1681 = vmatpush1.msra.mxu0 0.0
    %1682 = vmatprep.subr.mxu0 0.0
    %1683 = vmatpush1.msra.mxu0 0.0
    %1684 = vmatprep.subr.mxu0 0.0
    %1685 = vmatpush1.msra.mxu0 0.0
    %1686 = vmatprep.subr.mxu0 0.0
    %1687 = vmatpush1.msra.mxu0 0.0
    %1688 = vmatprep.subr.mxu0 0.0
    %1689 = vmatpush1.msra.mxu0 0.0
    %1690 = vmatprep.subr.mxu0 0.0
    %1691 = vmatpush1.msra.mxu0 0.0
    %1692 = vmatprep.subr.mxu0 0.0
    %1693 = vmatpush1.msra.mxu0 0.0
    %1694 = vmatprep.subr.mxu0 0.0
    %1695 = vmatpush1.msra.mxu0 0.0
    %1696 = vmatprep.subr.mxu0 0.0
    %1697 = vmatpush1.msra.mxu0 0.0
    %1698 = vmatprep.subr.mxu0 0.0
    %1699 = vmatpush1.msra.mxu0 0.0
    %1700 = vmatprep.subr.mxu0 0.0
    %1701 = vmatpush1.msra.mxu0 0.0
    %1702 = vmatprep.subr.mxu0 0.0
    %1703 = vmatpush1.msra.mxu0 0.0
    %1704 = vmatprep.subr.mxu0 0.0
    %1705 = vmatpush1.msra.mxu0 0.0
    %1706 = vmatprep.subr.mxu0 0.0
    %1707 = vmatpush1.msra.mxu0 0.0
    %1708 = vmatprep.subr.mxu0 0.0
    %1709 = vmatpush1.msra.mxu0 0.0
    %1710 = vmatprep.subr.mxu0 0.0
    %1711 = vmatpush1.msra.mxu0 0.0
    %1712 = vmatprep.subr.mxu0 0.0
    %1713 = vmatpush1.msra.mxu0 0.0
    %1714 = vmatprep.subr.mxu0 0.0
    %1715 = vmatpush1.msra.mxu0 0.0
    %1716 = vmatprep.subr.mxu0 0.0
    %1717 = vmatpush1.msra.mxu0 0.0
    %1718 = vmatprep.subr.mxu0 0.0
    %1719 = vmatpush1.msra.mxu0 0.0
    %1720 = vmatprep.subr.mxu0 0.0
    %1721 = vmatpush1.msra.mxu0 0.0
    %1722 = vmatprep.subr.mxu0 0.0
    %1723 = vmatpush1.msra.mxu0 0.0
    %1724 = vmatprep.subr.mxu0 0.0
    %1725 = vmatpush1.msra.mxu0 0.0
    %1726 = vmatprep.subr.mxu0 0.0
    %1727 = vmatpush1.msra.mxu0 0.0
    %1728 = vmatprep.subr.mxu0 0.0
    %1729 = vmatpush1.msra.mxu0 0.0
    %1730 = vmatprep.subr.mxu0 0.0
    %1731 = vmatpush1.msra.mxu0 0.0
    %1732 = vmatprep.mubr.f32.mxu0 0.0
    %1733 = vmatmul.mubr.f32.gmra.mrb[0].mxu0 %v1666
    %v1734 = vpop.f32.mrb[0].mxu0
    %v1735 = vadd.f32 0.0, %v1734
    %v1736 = vpop.f32.mrb[0].mxu0
    %1737 = vdwg.mxu0
    %v1739 = vrot.slane %v1735, 6
    %v1741 = vadd.f32 %v1141, %v1739
    %v1742 = vxor.u32 %v1741, 2147483648
    %v1743 = vmul.f32 %v1742, 1.442695
    %v1744 = vpow.pop %v1743
    %v1745 = vadd.f32 %v1744, 1.0
    %v1746 = vrcp.pop %v1745
    %v1747 = vmul.f32 1.0, %v1746
    %v1748 = vtanh.pop %v1741
    %v1750 = vrot.slane %v1656, 6
    %v1752 = vmul.f32 %v1747, %v1750
    %1754 = vrot.lane.b32.xlu0 %v1748, 64
    %v1755 = vpop.permute.xlu0 %1754
    %v1757 = vmul.f32 %v1747, %v1755
    %1759 = vrot.lane.b32.xlu0 %v1757, 32
    %v1760 = vpop.permute.xlu0 %1759
    %v1762 = vadd.f32 %v1752, %v1760
    %v1763 = vtanh.pop %v1762
    %1765 = vrot.lane.b32.xlu0 %v1763, 64
    %v1766 = vpop.permute.xlu0 %1765
    %v1768 = vmul.f32 %v1747, %v1766
    %v1770 = vrot.slane %v1768, 2
    %1771 = vrot.lane.b32.xlu0 %v1770, 32
    %v1772 = vpop.permute.xlu0 %1771
    %v1773 = vsel %vm192, %v1772, 0
    %1775 = vmatprep.subr.mxu0 0.0
    %1776 = vmatpush1.msra.mxu0 %v1048
    %1777 = vmatprep.subr.mxu0 0.0
    %1778 = vmatpush1.msra.mxu0 %v1049
    %1779 = vmatprep.subr.mxu0 0.0
    %1780 = vmatpush1.msra.mxu0 %v1050
    %1781 = vmatprep.subr.mxu0 0.0
    %1782 = vmatpush1.msra.mxu0 %v1051
    %1783 = vmatprep.subr.mxu0 0.0
    %1784 = vmatpush1.msra.mxu0 0.0
    %1785 = vmatprep.subr.mxu0 0.0
    %1786 = vmatpush1.msra.mxu0 0.0
    %1787 = vmatprep.subr.mxu0 0.0
    %1788 = vmatpush1.msra.mxu0 0.0
    %1789 = vmatprep.subr.mxu0 0.0
    %1790 = vmatpush1.msra.mxu0 0.0
    %1791 = vmatprep.subr.mxu0 0.0
    %1792 = vmatpush1.msra.mxu0 0.0
    %1793 = vmatprep.subr.mxu0 0.0
    %1794 = vmatpush1.msra.mxu0 0.0
    %1795 = vmatprep.subr.mxu0 0.0
    %1796 = vmatpush1.msra.mxu0 0.0
    %1797 = vmatprep.subr.mxu0 0.0
    %1798 = vmatpush1.msra.mxu0 0.0
    %1799 = vmatprep.subr.mxu0 0.0
    %1800 = vmatpush1.msra.mxu0 0.0
    %1801 = vmatprep.subr.mxu0 0.0
    %1802 = vmatpush1.msra.mxu0 0.0
    %1803 = vmatprep.subr.mxu0 0.0
    %1804 = vmatpush1.msra.mxu0 0.0
    %1805 = vmatprep.subr.mxu0 0.0
    %1806 = vmatpush1.msra.mxu0 0.0
    %1807 = vmatprep.subr.mxu0 0.0
    %1808 = vmatpush1.msra.mxu0 0.0
    %1809 = vmatprep.subr.mxu0 0.0
    %1810 = vmatpush1.msra.mxu0 0.0
    %1811 = vmatprep.subr.mxu0 0.0
    %1812 = vmatpush1.msra.mxu0 0.0
    %1813 = vmatprep.subr.mxu0 0.0
    %1814 = vmatpush1.msra.mxu0 0.0
    %1815 = vmatprep.subr.mxu0 0.0
    %1816 = vmatpush1.msra.mxu0 0.0
    %1817 = vmatprep.subr.mxu0 0.0
    %1818 = vmatpush1.msra.mxu0 0.0
    %1819 = vmatprep.subr.mxu0 0.0
    %1820 = vmatpush1.msra.mxu0 0.0
    %1821 = vmatprep.subr.mxu0 0.0
    %1822 = vmatpush1.msra.mxu0 0.0
    %1823 = vmatprep.subr.mxu0 0.0
    %1824 = vmatpush1.msra.mxu0 0.0
    %1825 = vmatprep.subr.mxu0 0.0
    %1826 = vmatpush1.msra.mxu0 0.0
    %1827 = vmatprep.subr.mxu0 0.0
    %1828 = vmatpush1.msra.mxu0 0.0
    %1829 = vmatprep.subr.mxu0 0.0
    %1830 = vmatpush1.msra.mxu0 0.0
    %1831 = vmatprep.subr.mxu0 0.0
    %1832 = vmatpush1.msra.mxu0 0.0
    %1833 = vmatprep.subr.mxu0 0.0
    %1834 = vmatpush1.msra.mxu0 0.0
    %1835 = vmatprep.subr.mxu0 0.0
    %1836 = vmatpush1.msra.mxu0 0.0
    %1837 = vmatprep.subr.mxu0 0.0
    %1838 = vmatpush1.msra.mxu0 0.0
    %1839 = vmatprep.mubr.f32.mxu0 0.0
    %1840 = vmatmul.mubr.f32.gmra.mrb[0].mxu0 %v1773
    %v1841 = vpop.f32.mrb[0].mxu0
    %v1842 = vadd.f32 0.0, %v1841
    %v1843 = vpop.f32.mrb[0].mxu0
    %1844 = vdwg.mxu0
    %v1846 = vrot.slane %v1842, 4
    %v1848 = vadd.f32 %v1141, %v1846
    %v1849 = vxor.u32 %v1848, 2147483648
    %v1850 = vmul.f32 %v1849, 1.442695
    %v1851 = vpow.pop %v1850
    %v1852 = vadd.f32 %v1851, 1.0
    %v1853 = vrcp.pop %v1852
    %v1854 = vmul.f32 1.0, %v1853
    %v1855 = vtanh.pop %v1848
    %v1857 = vrot.slane %v1762, 6
    %v1859 = vmul.f32 %v1854, %v1857
    %1861 = vrot.lane.b32.xlu0 %v1855, 64
    %v1862 = vpop.permute.xlu0 %1861
    %v1864 = vmul.f32 %v1854, %v1862
    %1866 = vrot.lane.b32.xlu0 %v1864, 32
    %v1867 = vpop.permute.xlu0 %1866
    %v1869 = vadd.f32 %v1859, %v1867
    %v1870 = vtanh.pop %v1869
    %1872 = vrot.lane.b32.xlu0 %v1870, 64
    %v1873 = vpop.permute.xlu0 %1872
    %v1875 = vmul.f32 %v1854, %v1873
    %v1877 = vrot.slane %v1875, 4
    %1878 = vrot.lane.b32.xlu0 %v1877, 32
    %v1879 = vpop.permute.xlu0 %1878
    %v1880 = vsel %vm192, %v1879, 0
    %1882 = vmatprep.subr.mxu0 0.0
    %1883 = vmatpush1.msra.mxu0 %v1048
    %1884 = vmatprep.subr.mxu0 0.0
    %1885 = vmatpush1.msra.mxu0 %v1049
    %1886 = vmatprep.subr.mxu0 0.0
    %1887 = vmatpush1.msra.mxu0 %v1050
    %1888 = vmatprep.subr.mxu0 0.0
    %1889 = vmatpush1.msra.mxu0 %v1051
    %1890 = vmatprep.subr.mxu0 0.0
    %1891 = vmatpush1.msra.mxu0 0.0
    %1892 = vmatprep.subr.mxu0 0.0
    %1893 = vmatpush1.msra.mxu0 0.0
    %1894 = vmatprep.subr.mxu0 0.0
    %1895 = vmatpush1.msra.mxu0 0.0
    %1896 = vmatprep.subr.mxu0 0.0
    %1897 = vmatpush1.msra.mxu0 0.0
    %1898 = vmatprep.subr.mxu0 0.0
    %1899 = vmatpush1.msra.mxu0 0.0
    %1900 = vmatprep.subr.mxu0 0.0
    %1901 = vmatpush1.msra.mxu0 0.0
    %1902 = vmatprep.subr.mxu0 0.0
    %1903 = vmatpush1.msra.mxu0 0.0
    %1904 = vmatprep.subr.mxu0 0.0
    %1905 = vmatpush1.msra.mxu0 0.0
    %1906 = vmatprep.subr.mxu0 0.0
    %1907 = vmatpush1.msra.mxu0 0.0
    %1908 = vmatprep.subr.mxu0 0.0
    %1909 = vmatpush1.msra.mxu0 0.0
    %1910 = vmatprep.subr.mxu0 0.0
    %1911 = vmatpush1.msra.mxu0 0.0
    %1912 = vmatprep.subr.mxu0 0.0
    %1913 = vmatpush1.msra.mxu0 0.0
    %1914 = vmatprep.subr.mxu0 0.0
    %1915 = vmatpush1.msra.mxu0 0.0
    %1916 = vmatprep.subr.mxu0 0.0
    %1917 = vmatpush1.msra.mxu0 0.0
    %1918 = vmatprep.subr.mxu0 0.0
    %1919 = vmatpush1.msra.mxu0 0.0
    %1920 = vmatprep.subr.mxu0 0.0
    %1921 = vmatpush1.msra.mxu0 0.0
    %1922 = vmatprep.subr.mxu0 0.0
    %1923 = vmatpush1.msra.mxu0 0.0
    %1924 = vmatprep.subr.mxu0 0.0
    %1925 = vmatpush1.msra.mxu0 0.0
    %1926 = vmatprep.subr.mxu0 0.0
    %1927 = vmatpush1.msra.mxu0 0.0
    %1928 = vmatprep.subr.mxu0 0.0
    %1929 = vmatpush1.msra.mxu0 0.0
    %1930 = vmatprep.subr.mxu0 0.0
    %1931 = vmatpush1.msra.mxu0 0.0
    %1932 = vmatprep.subr.mxu0 0.0
    %1933 = vmatpush1.msra.mxu0 0.0
    %1934 = vmatprep.subr.mxu0 0.0
    %1935 = vmatpush1.msra.mxu0 0.0
    %1936 = vmatprep.subr.mxu0 0.0
    %1937 = vmatpush1.msra.mxu0 0.0
    %1938 = vmatprep.subr.mxu0 0.0
    %1939 = vmatpush1.msra.mxu0 0.0
    %1940 = vmatprep.subr.mxu0 0.0
    %1941 = vmatpush1.msra.mxu0 0.0
    %1942 = vmatprep.subr.mxu0 0.0
    %1943 = vmatpush1.msra.mxu0 0.0
    %1944 = vmatprep.subr.mxu0 0.0
    %1945 = vmatpush1.msra.mxu0 0.0
    %1946 = vmatprep.mubr.f32.mxu0 0.0
    %1947 = vmatmul.mubr.f32.gmra.mrb[0].mxu0 %v1880
    %v1948 = vpop.f32.mrb[0].mxu0
    %v1949 = vadd.f32 0.0, %v1948
    %v1950 = vpop.f32.mrb[0].mxu0
    %1951 = vdwg.mxu0
    %v1953 = vrot.slane %v1949, 2
    %v1955 = vadd.f32 %v1141, %v1953
    %v1956 = vxor.u32 %v1955, 2147483648
    %v1957 = vmul.f32 %v1956, 1.442695
    %v1958 = vpow.pop %v1957
    %v1959 = vadd.f32 %v1958, 1.0
    %v1960 = vrcp.pop %v1959
    %v1961 = vmul.f32 1.0, %v1960
    %v1962 = vtanh.pop %v1955
    %v1964 = vrot.slane %v1869, 6
    %v1966 = vmul.f32 %v1961, %v1964
    %1968 = vrot.lane.b32.xlu0 %v1962, 64
    %v1969 = vpop.permute.xlu0 %1968
    %v1971 = vmul.f32 %v1961, %v1969
    %1973 = vrot.lane.b32.xlu0 %v1971, 32
    %v1974 = vpop.permute.xlu0 %1973
    %v1976 = vadd.f32 %v1966, %v1974
    %v1977 = vtanh.pop %v1976
    %1979 = vrot.lane.b32.xlu0 %v1977, 64
    %v1980 = vpop.permute.xlu0 %1979
    %v1982 = vmul.f32 %v1961, %v1980
    %v1983 = vsel %vm1035, %v1238, %v1344
    %v1984 = vsel %vm1037, %v1983, %v1451
    %v1985 = vsel %vm1039, %v1984, %v1558
    %v1986 = vsel %vm1035, %v1662, %v1768
    %v1987 = vsel %vm1037, %v1986, %v1875
    %v1988 = vsel %vm1039, %v1987, %v1982
    %1991 = vrot.lane.b32.xlu0 %v1985, 32
    %v1992 = vpop.permute.xlu0 %1991
    %1993 = vrot.lane.b32.xlu0 %v1988, 32
    %v1994 = vpop.permute.xlu0 %1993
    %1997 = vst.msk [vmem:[#allocation11] sm:$0xff] %vm192, %v1992
    %1998 = vst.msk [vmem:[#allocation11 + $0x8] sm:$0xff] %vm192, %v1994
    // Predicated region
    $region50: #{tpu_custom_call.1} parent=1 // pred_check
      _
    $region51: #{tpu_custom_call.1} parent=1 // pred_check_branch
      %2000 = sbr.rel (0) target = $region53
    $region52: #{tpu_custom_call.1} parent=1 // pred_region
      %s2002 = ssub.s32 256, 256
      %2003 = vsyncadd [#allocation4], %s2002
      %s2004 = sshll.u32 [#allocation11], 4
      %s2005 = int_to_ptr.vmem [resolvable:$true] %s2004
      %2010 = dma.vmem_to_hbm [thread:$0]  %s2005, 256, %s7, [#allocation4], 128, 128, 8
    $region53: #{tpu_custom_call.1} parent=1 // pred_fallthru
      _
    // Predicated region
    $region54: #{tpu_custom_call.1} parent=1 // pred_check
      _
    $region55: #{tpu_custom_call.1} parent=1 // pred_check_branch
      %2012 = sbr.rel (0) target = $region57
    $region56: #{tpu_custom_call.1} parent=1 // pred_region
      %2013 = dma.done [#allocation4], 256
    $region57: #{tpu_custom_call.1} parent=1 // pred_fallthru
      _
    %2014 = vsyncpa [#allocation3], 1
    %2015 = vsyncpa [#allocation6], 1
    %2016 = vsyncpa [#allocation9], 1
    %2017 = vsyncpa [#allocation4], 1

</llo_original>
